<compile_context>
chip_gen: v6e
topology: v6e:2x2x1
jax: 0.10.0
libtpu: 0.0.40
codegen_flags: <defaults>
</compile_context>

<pallas_src>
import functools

import jax
import jax.numpy as jnp
from jax.experimental import pallas as pl
from jax.experimental.pallas import tpu as pltpu

LANE = 128
_VMEM_LIMIT_BYTES = 48 * 1024 * 1024   # explicit scoped-VMEM limit (v5e default is 16 MiB)
_VMEM_BUDGET_BYTES = 36 * 1024 * 1024  # tile-selection budget (headroom under the limit / v7x 64 MiB)
_X_RESIDENT_BYTES = 8 * 1024 * 1024    # keep X VMEM-resident if it is at most this big


def _round_up(x, m):
    return ((x + m - 1) // m) * m


def _pad2(a, rows, cols):
    return jnp.zeros((rows, cols), a.dtype).at[:a.shape[0], :a.shape[1]].set(a)


# ------------------------------ Pallas kernels ------------------------------ #

def _epilogue(acc, inv_deg, x_self, w, b, apply_relu, out_dtype):
    """mean-scale, fused [W_l; W_r] matmul, bias (+ folded BN) and optional ReLU."""
    agg = (acc * inv_deg).astype(w.dtype)                 # exact f32 1/deg scaling
    z = jnp.concatenate([agg, x_self], axis=1)            # (tm, 2*d_in), bf16
    h = jnp.dot(z, w, preferred_element_type=jnp.float32) + b
    if apply_relu:
        h = jnp.maximum(h, 0.0)
    return h.astype(out_dtype)


def _resident_kernel(a_ref, inv_ref, x_ref, w_ref, b_ref, o_ref, acc_ref,
                     *, apply_relu, tm, tk):
    """X fully VMEM-resident: source and self rows are sliced from the same ref."""
    i = pl.program_id(0)
    k = pl.program_id(1)

    @pl.when(k == 0)
    def _():
        acc_ref[...] = jnp.zeros_like(acc_ref)

    ks = pl.multiple_of(k * tk, LANE)
    xs = x_ref[pl.ds(ks, tk), :]
    acc_ref[...] += jnp.dot(a_ref[...], xs, preferred_element_type=jnp.float32)

    @pl.when(k == pl.num_programs(1) - 1)
    def _():
        ms = pl.multiple_of(i * tm, LANE)
        x_self = x_ref[pl.ds(ms, tm), :]
        o_ref[...] = _epilogue(acc_ref[...], inv_ref[...], x_self,
                               w_ref[...], b_ref[...], apply_relu, o_ref.dtype)


def _streamed_kernel(a_ref, inv_ref, xs_ref, xd_ref, w_ref, b_ref, o_ref, acc_ref,
                     *, apply_relu):
    """Fallback when X is too large for VMEM residency: stream X blocks."""
    k = pl.program_id(1)

    @pl.when(k == 0)
    def _():
        acc_ref[...] = jnp.zeros_like(acc_ref)

    acc_ref[...] += jnp.dot(a_ref[...], xs_ref[...], preferred_element_type=jnp.float32)

    @pl.when(k == pl.num_programs(1) - 1)
    def _():
        o_ref[...] = _epilogue(acc_ref[...], inv_ref[...], xd_ref[...],
                               w_ref[...], b_ref[...], apply_relu, o_ref.dtype)


# ------------------------------ Layer wrapper ------------------------------- #

def _vmem_estimate(tm, tk, n_pad, d_in, d_out, resident_x, out_bytes):
    a = 2 * tm * tk * 2                           # double-buffered A tile (bf16)
    inv = 2 * tm * 4
    if resident_x:
        xb = 2 * n_pad * d_in * 2                 # conservative: assume 2 buffers
    else:
        xb = 2 * tk * d_in * 2 + 2 * tm * d_in * 2
    w = 2 * (2 * d_in) * d_out * 2
    b = 2 * d_out * 4
    acc = tm * d_in * 4
    out = 2 * tm * d_out * out_bytes
    return a + inv + xb + w + b + acc + out


def _select_tiles(n_pad, d_in, d_out, resident_x, out_bytes):
    tm_cands = [t for t in (512, 256, 128) if n_pad % t == 0]
    # Prefer >=2 row tiles so the "parallel" axis can shard across both v7x cores.
    tm_multi = [t for t in tm_cands if n_pad // t >= 2]
    tm_order = tm_multi if tm_multi else tm_cands
    tk_cands = [t for t in (2048, 1024, 512, 256, 128) if n_pad % t == 0]
    for tm in tm_order:
        for tk in tk_cands:
            if _vmem_estimate(tm, tk, n_pad, d_in, d_out, resident_x,
                              out_bytes) <= _VMEM_BUDGET_BYTES:
                return tm, tk
    return tm_order[-1], tk_cands[-1]


def sage_layer(adj, inv_deg, x, w, b, *, apply_relu, out_dtype):
    """One SAGEConv layer (+ folded eval BN + ReLU) on 128-padded inputs.

    adj:     (n_pad, n_pad) bf16 neighbor counts, A[dst, src]
    inv_deg: (n_pad, 1)     f32 per-destination 1/deg (1.0 for deg==0 / padded rows)
    x:       (n_pad, d_in)  bf16 node features
    w:       (2*d_in, d_out) bf16, rows [0:d_in]=W_l (agg), rows [d_in:]=W_r (self)
    b:       (1, d_out)     f32 bias (BN folded in for hidden layers)
    """
    n_pad = adj.shape[0]
    d_in = x.shape[1]
    d_out = w.shape[1]
    assert w.shape[0] == 2 * d_in
    out_bytes = jnp.dtype(out_dtype).itemsize

    resident_x = (n_pad * d_in * 2) <= _X_RESIDENT_BYTES
    tm, tk = _select_tiles(n_pad, d_in, d_out, resident_x, out_bytes)
    grid = (n_pad // tm, n_pad // tk)

    in_specs = [
        pl.BlockSpec((tm, tk), lambda i, k: (i, k)),          # A counts tile (streamed)
        pl.BlockSpec((tm, 1), lambda i, k: (i, 0)),           # 1/deg per destination row
    ]
    if resident_x:
        in_specs.append(pl.BlockSpec((n_pad, d_in), lambda i, k: (0, 0)))  # X resident
        args = [adj, inv_deg, x, w, b]
        kernel = functools.partial(_resident_kernel, apply_relu=apply_relu, tm=tm, tk=tk)
    else:
        in_specs += [
            pl.BlockSpec((tk, d_in), lambda i, k: (k, 0)),    # X source rows
            pl.BlockSpec((tm, d_in), lambda i, k: (i, 0)),    # X self rows
        ]
        args = [adj, inv_deg, x, x, w, b]
        kernel = functools.partial(_streamed_kernel, apply_relu=apply_relu)
    in_specs += [
        pl.BlockSpec((2 * d_in, d_out), lambda i, k: (0, 0)),  # [W_l; W_r] (resident)
        pl.BlockSpec((1, d_out), lambda i, k: (0, 0)),         # bias (resident)
    ]

    return pl.pallas_call(
        kernel,
        out_shape=jax.ShapeDtypeStruct((n_pad, d_out), out_dtype),
        grid_spec=pltpu.PrefetchScalarGridSpec(
            num_scalar_prefetch=0,
            grid=grid,
            in_specs=in_specs,
            out_specs=pl.BlockSpec((tm, d_out), lambda i, k: (i, 0)),
            scratch_shapes=[pltpu.VMEM((tm, d_in), jnp.float32)],
        ),
        compiler_params=pltpu.CompilerParams(
            dimension_semantics=("parallel", "arbitrary"),
            vmem_limit_bytes=_VMEM_LIMIT_BYTES),
    )(*args)


# ------------------------------ Model wrapper ------------------------------- #

def init_params(key, input_dim, hidden_dim, output_dim, num_layers):
    """Deterministic init; eval-mode BN folded into weights; padded to 128-multiples."""
    dims = [input_dim] + [hidden_dim] * (num_layers - 1) + [output_dim]
    params = []
    for li in range(num_layers):
        d_in, d_out = dims[li], dims[li + 1]
        d_in_p, d_out_p = _round_up(d_in, LANE), _round_up(d_out, LANE)
        key, k1, k2 = jax.random.split(key, 3)
        scale = 1.0 / jnp.sqrt(jnp.float32(d_in))
        # Stored transposed vs torch Linear: (d_in, d_out) so x @ W works.
        w_l = jax.random.uniform(k1, (d_in, d_out), jnp.float32, -1.0, 1.0) * scale
        w_r = jax.random.uniform(k2, (d_in, d_out), jnp.float32, -1.0, 1.0) * scale
        bias = jnp.zeros((d_out,), jnp.float32)
        if li < num_layers - 1:
            # Fold eval-mode BatchNorm1d into the linear layer:
            #   s = gamma * rsqrt(var + eps);  W' = W*s;  b' = (b - mean)*s + beta
            gamma = jnp.ones((d_out,), jnp.float32)
            beta = jnp.zeros((d_out,), jnp.float32)
            running_mean = jnp.zeros((d_out,), jnp.float32)
            running_var = jnp.ones((d_out,), jnp.float32)
            s = gamma * jax.lax.rsqrt(running_var + 1e-5)
            w_l = w_l * s
            w_r = w_r * s
            bias = (bias - running_mean) * s + beta
        w = jnp.concatenate(
            [_pad2(w_l, d_in_p, d_out_p), _pad2(w_r, d_in_p, d_out_p)],
            axis=0).astype(jnp.bfloat16)
        b = _pad2(bias[None, :], 1, d_out_p)
        params.append((w, b))
    return params


def build_adjacency(edge_index, num_nodes, num_nodes_pad):
    """Dense adjacency as raw neighbor counts + f32 inverse degree.

    Counts are small integers, exact in bf16; the f32 1/deg is applied inside
    the kernel epilogue so the mean aggregation matches the f32 reference.
    """
    # TODO(synk): for genuinely sparse/large graphs, replace the dense N x N
    # adjacency with a scalar-prefetch gather aggregation (O(|E|*d) bytes).
    # TODO(synk): further compress counts to int8 (v5e/v6e) or fp8-e4m3 (v7x)
    # to halve the dominant HBM stream once a mixed-dtype MXU path is plumbed.
    src, dst = edge_index[0], edge_index[1]
    counts = jnp.zeros((num_nodes, num_nodes), jnp.float32).at[dst, src].add(1.0)
    deg = counts.sum(axis=1, keepdims=True)
    inv = jnp.where(deg > 0, 1.0 / jnp.maximum(deg, 1.0), 1.0)
    counts_p = _pad2(counts, num_nodes_pad, num_nodes_pad).astype(jnp.bfloat16)
    inv_p = jnp.ones((num_nodes_pad, 1), jnp.float32).at[:num_nodes, :].set(inv)
    return counts_p, inv_p


@jax.jit
def graphsage_forward(x, adj, inv_deg, params):
    # TODO(synk): for small graphs where A and X fit VMEM, fuse all layers into
    # a single pallas_call keeping A resident (saves (num_layers-1) A reads).
    for (w, b) in params[:-1]:
        x = sage_layer(adj, inv_deg, x, w, b, apply_relu=True, out_dtype=jnp.bfloat16)
        # TODO(synk): dropout skipped — module evaluated with training=False.
    w, b = params[-1]
    return sage_layer(adj, inv_deg, x, w, b, apply_relu=False, out_dtype=jnp.float32)


# ---------------------------------- Main ------------------------------------ #

if __name__ == "__main__":
    num_nodes = 64
    input_dim, hidden_dim, output_dim = 16, 32, 8
    num_layers = 3
    num_edges = 256

    n_pad = _round_up(num_nodes, LANE)
    d_in_pad = _round_up(input_dim, LANE)

    key = jax.random.PRNGKey(0)
    k_x, k_src, k_dst, k_params = jax.random.split(key, 4)

    x = jax.random.normal(k_x, (num_nodes, input_dim), jnp.float32)
    edge_index = jnp.stack([
        jax.random.randint(k_src, (num_edges,), 0, num_nodes),
        jax.random.randint(k_dst, (num_edges,), 0, num_nodes),
    ])

    adj, inv_deg = build_adjacency(edge_index, num_nodes, n_pad)
    x_p = _pad2(x, n_pad, d_in_pad).astype(jnp.bfloat16)
    params = init_params(k_params, input_dim, hidden_dim, output_dim, num_layers)

    out_padded = graphsage_forward(x_p, adj, inv_deg, params)
    jax.block_until_ready(out_padded)
    out = out_padded[:num_nodes, :output_dim]

    assert out.shape == (num_nodes, output_dim), out.shape
    assert out.dtype == jnp.float32
    print("KERNEL_OK")
</pallas_src>

<mosaic_0001>
module attributes {stable_mosaic.version = 11 : i64} {
  func.func @_resident_kernel(%arg0: i32, %arg1: i32, %arg2: memref<128x128xbf16, #tpu.memory_space<vmem>>, %arg3: memref<128x1xf32, #tpu.memory_space<vmem>>, %arg4: memref<128x128xbf16, #tpu.memory_space<vmem>>, %arg5: memref<256x128xbf16, #tpu.memory_space<vmem>>, %arg6: memref<1x128xf32, #tpu.memory_space<vmem>>, %arg7: memref<128x128xbf16, #tpu.memory_space<vmem>>, %arg8: memref<128x128xf32, #tpu.memory_space<vmem>>) attributes {dimension_semantics = [#tpu.dimension_semantics<parallel>, #tpu.dimension_semantics<arbitrary>], iteration_bounds = array<i64: 1, 1>, scalar_prefetch = 0 : i64, scratch_operands = 1 : i64, tpu.core_type = #tpu.core_type<tc>, window_params = [{transform_indices = @transform_0, window_bounds = array<i64: 128, 128>}, {transform_indices = @transform_1, window_bounds = array<i64: 128, 1>}, {pipeline_mode = #tpu.pipeline_mode<synchronous>, transform_indices = @transform_2, window_bounds = array<i64: 128, 128>}, {pipeline_mode = #tpu.pipeline_mode<synchronous>, transform_indices = @transform_3, window_bounds = array<i64: 256, 128>}, {pipeline_mode = #tpu.pipeline_mode<synchronous>, transform_indices = @transform_4, window_bounds = array<i64: 1, 128>}, {transform_indices = @transform_5, window_bounds = array<i64: 128, 128>}]} {
    %c0_i32 = arith.constant 0 : i32
    %0 = arith.cmpi eq, %arg1, %c0_i32 : i32
    %1 = arith.extui %0 : i1 to i32
    %c0_i32_0 = arith.constant 0 : i32
    %2 = arith.cmpi ne, %1, %c0_i32_0 : i32
    scf.if %2 {
      %cst_9 = arith.constant 0.000000e+00 : f32
      %15 = vector.broadcast %cst_9 : f32 to vector<128x128xf32>
      %c0_10 = arith.constant 0 : index
      %c0_11 = arith.constant 0 : index
      %16 = vector.load %arg8[%c0_10, %c0_11] : memref<128x128xf32, #tpu.memory_space<vmem>>, vector<128x128xf32>
      tpu.vector_store %arg8[%c0_10, %c0_11], %15 {strides = array<i32>} : memref<128x128xf32, #tpu.memory_space<vmem>>, vector<128x128xf32>,
    } else {
    }
    %c128_i32 = arith.constant 128 : i32
    %3 = arith.muli %arg1, %c128_i32 : i32
    %4 = tpu.assume_multiple %3, 128 : i32
    %5 = arith.index_cast %4 : i32 to index
    %c0 = arith.constant 0 : index
    %6 = vector.load %arg4[%5, %c0] : memref<128x128xbf16, #tpu.memory_space<vmem>>, vector<128x128xbf16>
    %c0_1 = arith.constant 0 : index
    %c0_2 = arith.constant 0 : index
    %7 = vector.load %arg8[%c0_1, %c0_2] : memref<128x128xf32, #tpu.memory_space<vmem>>, vector<128x128xf32>
    %c0_3 = arith.constant 0 : index
    %c0_4 = arith.constant 0 : index
    %8 = vector.load %arg2[%c0_3, %c0_4] : memref<128x128xbf16, #tpu.memory_space<vmem>>, vector<128x128xbf16>
    %cst = arith.constant dense<0.000000e+00> : vector<128x128xf32>
    %9 = tpu.matmul %8, %6, %cst {dimension_numbers = #tpu.dot_dimension_numbers<[1], [0], [0], [1], [0, 0, 1, 1], [], []>} : vector<128x128xbf16>, vector<128x128xbf16>, vector<128x128xf32> -> vector<128x128xf32>
    %10 = arith.addf %7, %9 : vector<128x128xf32>
    %c0_5 = arith.constant 0 : index
    %c0_6 = arith.constant 0 : index
    %11 = vector.load %arg8[%c0_5, %c0_6] : memref<128x128xf32, #tpu.memory_space<vmem>>, vector<128x128xf32>
    tpu.vector_store %arg8[%c0_5, %c0_6], %10 {strides = array<i32>} : memref<128x128xf32, #tpu.memory_space<vmem>>, vector<128x128xf32>,
    %c0_i32_7 = arith.constant 0 : i32
    %12 = arith.cmpi eq, %arg1, %c0_i32_7 : i32
    %13 = arith.extui %12 : i1 to i32
    %c0_i32_8 = arith.constant 0 : i32
    %14 = arith.cmpi ne, %13, %c0_i32_8 : i32
    scf.if %14 {
      %c128_i32_9 = arith.constant 128 : i32
      %15 = arith.muli %arg0, %c128_i32_9 : i32
      %16 = tpu.assume_multiple %15, 128 : i32
      %17 = arith.index_cast %16 : i32 to index
      %c0_10 = arith.constant 0 : index
      %18 = vector.load %arg4[%17, %c0_10] : memref<128x128xbf16, #tpu.memory_space<vmem>>, vector<128x128xbf16>
      %c0_11 = arith.constant 0 : index
      %c0_12 = arith.constant 0 : index
      %19 = vector.load %arg8[%c0_11, %c0_12] : memref<128x128xf32, #tpu.memory_space<vmem>>, vector<128x128xf32>
      %c0_13 = arith.constant 0 : index
      %c0_14 = arith.constant 0 : index
      %20 = vector.load %arg3[%c0_13, %c0_14] : memref<128x1xf32, #tpu.memory_space<vmem>>, vector<128x1xf32>
      %c0_15 = arith.constant 0 : index
      %c0_16 = arith.constant 0 : index
      %21 = vector.load %arg5[%c0_15, %c0_16] : memref<256x128xbf16, #tpu.memory_space<vmem>>, vector<256x128xbf16>
      %c0_17 = arith.constant 0 : index
      %c0_18 = arith.constant 0 : index
      %22 = vector.load %arg6[%c0_17, %c0_18] : memref<1x128xf32, #tpu.memory_space<vmem>>, vector<1x128xf32>
      %23 = vector.broadcast %20 : vector<128x1xf32> to vector<128x128xf32>
      %24 = arith.mulf %19, %23 : vector<128x128xf32>
      %25 = arith.truncf %24 : vector<128x128xf32> to vector<128x128xbf16>
      %26 = tpu.concatenate %25, %18 in 1 : vector<128x128xbf16>, vector<128x128xbf16> -> vector<128x256xbf16>
      %cst_19 = arith.constant dense<0.000000e+00> : vector<128x128xf32>
      %27 = tpu.matmul %26, %21, %cst_19 {dimension_numbers = #tpu.dot_dimension_numbers<[1], [0], [0], [1], [0, 0, 1, 1], [], []>} : vector<128x256xbf16>, vector<256x128xbf16>, vector<128x128xf32> -> vector<128x128xf32>
      %28 = vector.broadcast %22 : vector<1x128xf32> to vector<128x128xf32>
      %29 = arith.addf %27, %28 : vector<128x128xf32>
      %cst_20 = arith.constant 0.000000e+00 : f32
      %30 = vector.broadcast %cst_20 : f32 to vector<128x128xf32>
      %31 = arith.maximumf %29, %30 : vector<128x128xf32>
      %32 = arith.truncf %31 : vector<128x128xf32> to vector<128x128xbf16>
      %c0_21 = arith.constant 0 : index
      %c0_22 = arith.constant 0 : index
      %33 = vector.load %arg7[%c0_21, %c0_22] : memref<128x128xbf16, #tpu.memory_space<vmem>>, vector<128x128xbf16>
      tpu.vector_store %arg7[%c0_21, %c0_22], %32 {strides = array<i32>} : memref<128x128xbf16, #tpu.memory_space<vmem>>, vector<128x128xbf16>,
    } else {
    }
    return
  }
  func.func @transform_0(%arg0: i32, %arg1: i32) -> (i32, i32) {
    %c0_i32 = arith.constant 0 : i32
    return %arg0, %arg1 : i32, i32
  }
  func.func @transform_1(%arg0: i32, %arg1: i32) -> (i32, i32) {
    %c0_i32 = arith.constant 0 : i32
    %c0_i32_0 = arith.constant 0 : i32
    return %arg0, %c0_i32 : i32, i32
  }
  func.func @transform_2(%arg0: i32, %arg1: i32) -> (i32, i32) {
    %c0_i32 = arith.constant 0 : i32
    %c0_i32_0 = arith.constant 0 : i32
    %c0_i32_1 = arith.constant 0 : i32
    return %c0_i32, %c0_i32_0 : i32, i32
  }
  func.func @transform_3(%arg0: i32, %arg1: i32) -> (i32, i32) {
    %c0_i32 = arith.constant 0 : i32
    %c0_i32_0 = arith.constant 0 : i32
    %c0_i32_1 = arith.constant 0 : i32
    return %c0_i32, %c0_i32_0 : i32, i32
  }
  func.func @transform_4(%arg0: i32, %arg1: i32) -> (i32, i32) {
    %c0_i32 = arith.constant 0 : i32
    %c0_i32_0 = arith.constant 0 : i32
    %c0_i32_1 = arith.constant 0 : i32
    return %c0_i32, %c0_i32_0 : i32, i32
  }
  func.func @transform_5(%arg0: i32, %arg1: i32) -> (i32, i32) {
    %c0_i32 = arith.constant 0 : i32
    %c0_i32_0 = arith.constant 0 : i32
    return %arg0, %c0_i32 : i32, i32
  }
}

module attributes {stable_mosaic.version = 11 : i64} {
  func.func @_resident_kernel(%arg0: i32, %arg1: i32, %arg2: memref<128x128xbf16, #tpu.memory_space<vmem>>, %arg3: memref<128x1xf32, #tpu.memory_space<vmem>>, %arg4: memref<128x128xbf16, #tpu.memory_space<vmem>>, %arg5: memref<256x128xbf16, #tpu.memory_space<vmem>>, %arg6: memref<1x128xf32, #tpu.memory_space<vmem>>, %arg7: memref<128x128xf32, #tpu.memory_space<vmem>>, %arg8: memref<128x128xf32, #tpu.memory_space<vmem>>) attributes {dimension_semantics = [#tpu.dimension_semantics<parallel>, #tpu.dimension_semantics<arbitrary>], iteration_bounds = array<i64: 1, 1>, scalar_prefetch = 0 : i64, scratch_operands = 1 : i64, tpu.core_type = #tpu.core_type<tc>, window_params = [{transform_indices = @transform_0, window_bounds = array<i64: 128, 128>}, {transform_indices = @transform_1, window_bounds = array<i64: 128, 1>}, {pipeline_mode = #tpu.pipeline_mode<synchronous>, transform_indices = @transform_2, window_bounds = array<i64: 128, 128>}, {pipeline_mode = #tpu.pipeline_mode<synchronous>, transform_indices = @transform_3, window_bounds = array<i64: 256, 128>}, {pipeline_mode = #tpu.pipeline_mode<synchronous>, transform_indices = @transform_4, window_bounds = array<i64: 1, 128>}, {transform_indices = @transform_5, window_bounds = array<i64: 128, 128>}]} {
    %c0_i32 = arith.constant 0 : i32
    %0 = arith.cmpi eq, %arg1, %c0_i32 : i32
    %1 = arith.extui %0 : i1 to i32
    %c0_i32_0 = arith.constant 0 : i32
    %2 = arith.cmpi ne, %1, %c0_i32_0 : i32
    scf.if %2 {
      %cst_9 = arith.constant 0.000000e+00 : f32
      %15 = vector.broadcast %cst_9 : f32 to vector<128x128xf32>
      %c0_10 = arith.constant 0 : index
      %c0_11 = arith.constant 0 : index
      %16 = vector.load %arg8[%c0_10, %c0_11] : memref<128x128xf32, #tpu.memory_space<vmem>>, vector<128x128xf32>
      tpu.vector_store %arg8[%c0_10, %c0_11], %15 {strides = array<i32>} : memref<128x128xf32, #tpu.memory_space<vmem>>, vector<128x128xf32>,
    } else {
    }
    %c128_i32 = arith.constant 128 : i32
    %3 = arith.muli %arg1, %c128_i32 : i32
    %4 = tpu.assume_multiple %3, 128 : i32
    %5 = arith.index_cast %4 : i32 to index
    %c0 = arith.constant 0 : index
    %6 = vector.load %arg4[%5, %c0] : memref<128x128xbf16, #tpu.memory_space<vmem>>, vector<128x128xbf16>
    %c0_1 = arith.constant 0 : index
    %c0_2 = arith.constant 0 : index
    %7 = vector.load %arg8[%c0_1, %c0_2] : memref<128x128xf32, #tpu.memory_space<vmem>>, vector<128x128xf32>
    %c0_3 = arith.constant 0 : index
    %c0_4 = arith.constant 0 : index
    %8 = vector.load %arg2[%c0_3, %c0_4] : memref<128x128xbf16, #tpu.memory_space<vmem>>, vector<128x128xbf16>
    %cst = arith.constant dense<0.000000e+00> : vector<128x128xf32>
    %9 = tpu.matmul %8, %6, %cst {dimension_numbers = #tpu.dot_dimension_numbers<[1], [0], [0], [1], [0, 0, 1, 1], [], []>} : vector<128x128xbf16>, vector<128x128xbf16>, vector<128x128xf32> -> vector<128x128xf32>
    %10 = arith.addf %7, %9 : vector<128x128xf32>
    %c0_5 = arith.constant 0 : index
    %c0_6 = arith.constant 0 : index
    %11 = vector.load %arg8[%c0_5, %c0_6] : memref<128x128xf32, #tpu.memory_space<vmem>>, vector<128x128xf32>
    tpu.vector_store %arg8[%c0_5, %c0_6], %10 {strides = array<i32>} : memref<128x128xf32, #tpu.memory_space<vmem>>, vector<128x128xf32>,
    %c0_i32_7 = arith.constant 0 : i32
    %12 = arith.cmpi eq, %arg1, %c0_i32_7 : i32
    %13 = arith.extui %12 : i1 to i32
    %c0_i32_8 = arith.constant 0 : i32
    %14 = arith.cmpi ne, %13, %c0_i32_8 : i32
    scf.if %14 {
      %c128_i32_9 = arith.constant 128 : i32
      %15 = arith.muli %arg0, %c128_i32_9 : i32
      %16 = tpu.assume_multiple %15, 128 : i32
      %17 = arith.index_cast %16 : i32 to index
      %c0_10 = arith.constant 0 : index
      %18 = vector.load %arg4[%17, %c0_10] : memref<128x128xbf16, #tpu.memory_space<vmem>>, vector<128x128xbf16>
      %c0_11 = arith.constant 0 : index
      %c0_12 = arith.constant 0 : index
      %19 = vector.load %arg8[%c0_11, %c0_12] : memref<128x128xf32, #tpu.memory_space<vmem>>, vector<128x128xf32>
      %c0_13 = arith.constant 0 : index
      %c0_14 = arith.constant 0 : index
      %20 = vector.load %arg3[%c0_13, %c0_14] : memref<128x1xf32, #tpu.memory_space<vmem>>, vector<128x1xf32>
      %c0_15 = arith.constant 0 : index
      %c0_16 = arith.constant 0 : index
      %21 = vector.load %arg5[%c0_15, %c0_16] : memref<256x128xbf16, #tpu.memory_space<vmem>>, vector<256x128xbf16>
      %c0_17 = arith.constant 0 : index
      %c0_18 = arith.constant 0 : index
      %22 = vector.load %arg6[%c0_17, %c0_18] : memref<1x128xf32, #tpu.memory_space<vmem>>, vector<1x128xf32>
      %23 = vector.broadcast %20 : vector<128x1xf32> to vector<128x128xf32>
      %24 = arith.mulf %19, %23 : vector<128x128xf32>
      %25 = arith.truncf %24 : vector<128x128xf32> to vector<128x128xbf16>
      %26 = tpu.concatenate %25, %18 in 1 : vector<128x128xbf16>, vector<128x128xbf16> -> vector<128x256xbf16>
      %cst_19 = arith.constant dense<0.000000e+00> : vector<128x128xf32>
      %27 = tpu.matmul %26, %21, %cst_19 {dimension_numbers = #tpu.dot_dimension_numbers<[1], [0], [0], [1], [0, 0, 1, 1], [], []>} : vector<128x256xbf16>, vector<256x128xbf16>, vector<128x128xf32> -> vector<128x128xf32>
      %28 = vector.broadcast %22 : vector<1x128xf32> to vector<128x128xf32>
      %29 = arith.addf %27, %28 : vector<128x128xf32>
      %c0_20 = arith.constant 0 : index
      %c0_21 = arith.constant 0 : index
      %30 = vector.load %arg7[%c0_20, %c0_21] : memref<128x128xf32, #tpu.memory_space<vmem>>, vector<128x128xf32>
      tpu.vector_store %arg7[%c0_20, %c0_21], %29 {strides = array<i32>} : memref<128x128xf32, #tpu.memory_space<vmem>>, vector<128x128xf32>,
    } else {
    }
    return
  }
  func.func @transform_0(%arg0: i32, %arg1: i32) -> (i32, i32) {
    %c0_i32 = arith.constant 0 : i32
    return %arg0, %arg1 : i32, i32
  }
  func.func @transform_1(%arg0: i32, %arg1: i32) -> (i32, i32) {
    %c0_i32 = arith.constant 0 : i32
    %c0_i32_0 = arith.constant 0 : i32
    return %arg0, %c0_i32 : i32, i32
  }
  func.func @transform_2(%arg0: i32, %arg1: i32) -> (i32, i32) {
    %c0_i32 = arith.constant 0 : i32
    %c0_i32_0 = arith.constant 0 : i32
    %c0_i32_1 = arith.constant 0 : i32
    return %c0_i32, %c0_i32_0 : i32, i32
  }
  func.func @transform_3(%arg0: i32, %arg1: i32) -> (i32, i32) {
    %c0_i32 = arith.constant 0 : i32
    %c0_i32_0 = arith.constant 0 : i32
    %c0_i32_1 = arith.constant 0 : i32
    return %c0_i32, %c0_i32_0 : i32, i32
  }
  func.func @transform_4(%arg0: i32, %arg1: i32) -> (i32, i32) {
    %c0_i32 = arith.constant 0 : i32
    %c0_i32_0 = arith.constant 0 : i32
    %c0_i32_1 = arith.constant 0 : i32
    return %c0_i32, %c0_i32_0 : i32, i32
  }
  func.func @transform_5(%arg0: i32, %arg1: i32) -> (i32, i32) {
    %c0_i32 = arith.constant 0 : i32
    %c0_i32_0 = arith.constant 0 : i32
    return %arg0, %c0_i32 : i32, i32
  }
}

module attributes {stable_mosaic.version = 11 : i64} {
  func.func @_resident_kernel(%arg0: i32, %arg1: i32, %arg2: memref<128x128xbf16, #tpu.memory_space<vmem>>, %arg3: memref<128x1xf32, #tpu.memory_space<vmem>>, %arg4: memref<128x128xbf16, #tpu.memory_space<vmem>>, %arg5: memref<256x128xbf16, #tpu.memory_space<vmem>>, %arg6: memref<1x128xf32, #tpu.memory_space<vmem>>, %arg7: memref<128x128xbf16, #tpu.memory_space<vmem>>, %arg8: memref<128x128xf32, #tpu.memory_space<vmem>>) attributes {dimension_semantics = [#tpu.dimension_semantics<parallel>, #tpu.dimension_semantics<arbitrary>], iteration_bounds = array<i64: 1, 1>, scalar_prefetch = 0 : i64, scratch_operands = 1 : i64, tpu.core_type = #tpu.core_type<tc>, window_params = [{transform_indices = @transform_0, window_bounds = array<i64: 128, 128>}, {transform_indices = @transform_1, window_bounds = array<i64: 128, 1>}, {pipeline_mode = #tpu.pipeline_mode<synchronous>, transform_indices = @transform_2, window_bounds = array<i64: 128, 128>}, {pipeline_mode = #tpu.pipeline_mode<synchronous>, transform_indices = @transform_3, window_bounds = array<i64: 256, 128>}, {pipeline_mode = #tpu.pipeline_mode<synchronous>, transform_indices = @transform_4, window_bounds = array<i64: 1, 128>}, {transform_indices = @transform_5, window_bounds = array<i64: 128, 128>}]} {
    %c0_i32 = arith.constant 0 : i32
    %0 = arith.cmpi eq, %arg1, %c0_i32 : i32
    %1 = arith.extui %0 : i1 to i32
    %c0_i32_0 = arith.constant 0 : i32
    %2 = arith.cmpi ne, %1, %c0_i32_0 : i32
    scf.if %2 {
      %cst_9 = arith.constant 0.000000e+00 : f32
      %15 = vector.broadcast %cst_9 : f32 to vector<128x128xf32>
      %c0_10 = arith.constant 0 : index
      %c0_11 = arith.constant 0 : index
      %16 = vector.load %arg8[%c0_10, %c0_11] : memref<128x128xf32, #tpu.memory_space<vmem>>, vector<128x128xf32>
      tpu.vector_store %arg8[%c0_10, %c0_11], %15 {strides = array<i32>} : memref<128x128xf32, #tpu.memory_space<vmem>>, vector<128x128xf32>,
    } else {
    }
    %c128_i32 = arith.constant 128 : i32
    %3 = arith.muli %arg1, %c128_i32 : i32
    %4 = tpu.assume_multiple %3, 128 : i32
    %5 = arith.index_cast %4 : i32 to index
    %c0 = arith.constant 0 : index
    %6 = vector.load %arg4[%5, %c0] : memref<128x128xbf16, #tpu.memory_space<vmem>>, vector<128x128xbf16>
    %c0_1 = arith.constant 0 : index
    %c0_2 = arith.constant 0 : index
    %7 = vector.load %arg8[%c0_1, %c0_2] : memref<128x128xf32, #tpu.memory_space<vmem>>, vector<128x128xf32>
    %c0_3 = arith.constant 0 : index
    %c0_4 = arith.constant 0 : index
    %8 = vector.load %arg2[%c0_3, %c0_4] : memref<128x128xbf16, #tpu.memory_space<vmem>>, vector<128x128xbf16>
    %cst = arith.constant dense<0.000000e+00> : vector<128x128xf32>
    %9 = tpu.matmul %8, %6, %cst {dimension_numbers = #tpu.dot_dimension_numbers<[1], [0], [0], [1], [0, 0, 1, 1], [], []>} : vector<128x128xbf16>, vector<128x128xbf16>, vector<128x128xf32> -> vector<128x128xf32>
    %10 = arith.addf %7, %9 : vector<128x128xf32>
    %c0_5 = arith.constant 0 : index
    %c0_6 = arith.constant 0 : index
    %11 = vector.load %arg8[%c0_5, %c0_6] : memref<128x128xf32, #tpu.memory_space<vmem>>, vector<128x128xf32>
    tpu.vector_store %arg8[%c0_5, %c0_6], %10 {strides = array<i32>} : memref<128x128xf32, #tpu.memory_space<vmem>>, vector<128x128xf32>,
    %c0_i32_7 = arith.constant 0 : i32
    %12 = arith.cmpi eq, %arg1, %c0_i32_7 : i32
    %13 = arith.extui %12 : i1 to i32
    %c0_i32_8 = arith.constant 0 : i32
    %14 = arith.cmpi ne, %13, %c0_i32_8 : i32
    scf.if %14 {
      %c128_i32_9 = arith.constant 128 : i32
      %15 = arith.muli %arg0, %c128_i32_9 : i32
      %16 = tpu.assume_multiple %15, 128 : i32
      %17 = arith.index_cast %16 : i32 to index
      %c0_10 = arith.constant 0 : index
      %18 = vector.load %arg4[%17, %c0_10] : memref<128x128xbf16, #tpu.memory_space<vmem>>, vector<128x128xbf16>
      %c0_11 = arith.constant 0 : index
      %c0_12 = arith.constant 0 : index
      %19 = vector.load %arg8[%c0_11, %c0_12] : memref<128x128xf32, #tpu.memory_space<vmem>>, vector<128x128xf32>
      %c0_13 = arith.constant 0 : index
      %c0_14 = arith.constant 0 : index
      %20 = vector.load %arg3[%c0_13, %c0_14] : memref<128x1xf32, #tpu.memory_space<vmem>>, vector<128x1xf32>
      %c0_15 = arith.constant 0 : index
      %c0_16 = arith.constant 0 : index
      %21 = vector.load %arg5[%c0_15, %c0_16] : memref<256x128xbf16, #tpu.memory_space<vmem>>, vector<256x128xbf16>
      %c0_17 = arith.constant 0 : index
      %c0_18 = arith.constant 0 : index
      %22 = vector.load %arg6[%c0_17, %c0_18] : memref<1x128xf32, #tpu.memory_space<vmem>>, vector<1x128xf32>
      %23 = vector.broadcast %20 : vector<128x1xf32> to vector<128x128xf32>
      %24 = arith.mulf %19, %23 : vector<128x128xf32>
      %25 = arith.truncf %24 : vector<128x128xf32> to vector<128x128xbf16>
      %26 = tpu.concatenate %25, %18 in 1 : vector<128x128xbf16>, vector<128x128xbf16> -> vector<128x256xbf16>
      %cst_19 = arith.constant dense<0.000000e+00> : vector<128x128xf32>
      %27 = tpu.matmul %26, %21, %cst_19 {dimension_numbers = #tpu.dot_dimension_numbers<[1], [0], [0], [1], [0, 0, 1, 1], [], []>} : vector<128x256xbf16>, vector<256x128xbf16>, vector<128x128xf32> -> vector<128x128xf32>
      %28 = vector.broadcast %22 : vector<1x128xf32> to vector<128x128xf32>
      %29 = arith.addf %27, %28 : vector<128x128xf32>
      %cst_20 = arith.constant 0.000000e+00 : f32
      %30 = vector.broadcast %cst_20 : f32 to vector<128x128xf32>
      %31 = arith.maximumf %29, %30 : vector<128x128xf32>
      %32 = arith.truncf %31 : vector<128x128xf32> to vector<128x128xbf16>
      %c0_21 = arith.constant 0 : index
      %c0_22 = arith.constant 0 : index
      %33 = vector.load %arg7[%c0_21, %c0_22] : memref<128x128xbf16, #tpu.memory_space<vmem>>, vector<128x128xbf16>
      tpu.vector_store %arg7[%c0_21, %c0_22], %32 {strides = array<i32>} : memref<128x128xbf16, #tpu.memory_space<vmem>>, vector<128x128xbf16>,
    } else {
    }
    return
  }
  func.func @transform_0(%arg0: i32, %arg1: i32) -> (i32, i32) {
    %c0_i32 = arith.constant 0 : i32
    return %arg0, %arg1 : i32, i32
  }
  func.func @transform_1(%arg0: i32, %arg1: i32) -> (i32, i32) {
    %c0_i32 = arith.constant 0 : i32
    %c0_i32_0 = arith.constant 0 : i32
    return %arg0, %c0_i32 : i32, i32
  }
  func.func @transform_2(%arg0: i32, %arg1: i32) -> (i32, i32) {
    %c0_i32 = arith.constant 0 : i32
    %c0_i32_0 = arith.constant 0 : i32
    %c0_i32_1 = arith.constant 0 : i32
    return %c0_i32, %c0_i32_0 : i32, i32
  }
  func.func @transform_3(%arg0: i32, %arg1: i32) -> (i32, i32) {
    %c0_i32 = arith.constant 0 : i32
    %c0_i32_0 = arith.constant 0 : i32
    %c0_i32_1 = arith.constant 0 : i32
    return %c0_i32, %c0_i32_0 : i32, i32
  }
  func.func @transform_4(%arg0: i32, %arg1: i32) -> (i32, i32) {
    %c0_i32 = arith.constant 0 : i32
    %c0_i32_0 = arith.constant 0 : i32
    %c0_i32_1 = arith.constant 0 : i32
    return %c0_i32, %c0_i32_0 : i32, i32
  }
  func.func @transform_5(%arg0: i32, %arg1: i32) -> (i32, i32) {
    %c0_i32 = arith.constant 0 : i32
    %c0_i32_0 = arith.constant 0 : i32
    return %arg0, %c0_i32 : i32, i32
  }
}

</mosaic_0001>

<llo_original>
// kernel: graphsage_forward.4
$region0: #{graphsage_forward.4}
  #allocation0 [shape = 'u32[]', space=smem, size = 0x4, offset = 0x4, fixed_abs, tag = 'smem constant byte address 0x4 - core index']
  #allocation1 [shape = 'u32[144,128]{1,0:T(1,128)}', space=vmem, size = 0x12000, scoped, tag = 'internal scratch']
  #allocation2 [shape = 'f32[128,128]{1,0:T(8,128)}', space=vmem, size = 0x10000, scoped, tag = 'scratch operand']
  %s0 = inlined_call_operand.vmem [shape: bf16[128,128], index: 0, kind: input, shape index: {}]
  %s1 = inlined_call_operand.vmem [shape: f32[128,1], index: 1, kind: input, shape index: {}]
  %s2 = inlined_call_operand.vmem [shape: bf16[128,128], index: 2, kind: input, shape index: {}]
  %s3 = inlined_call_operand.vmem [shape: bf16[256,128], index: 3, kind: input, shape index: {}]
  %s4 = inlined_call_operand.vmem [shape: f32[1,128], index: 4, kind: input, shape index: {}]
  %s5 = inlined_call_operand.vmem [shape: bf16[128,128], index: 5, kind: output, shape index: {}]
  %s6 = sld [smem:[#allocation0]]
  $region38: #{graphsage_forward.4} parent=0
    _
  %s8 = ssub.s32 1, %s6
  %s9 = scalar_select 0, %s8, %s6
  // Predicated region
  $region2: #{graphsage_forward.4} parent=0 // pred_check
    _
  $region3: #{graphsage_forward.4} parent=0 // pred_check_branch
    %11 = sbr.rel (0) target = $region5
  $region4: #{graphsage_forward.4} parent=0 // pred_region
    _
  $region5: #{graphsage_forward.4} parent=0 // pred_fallthru
    _
  // Predicated region
  $region6: #{graphsage_forward.4} parent=0 // pred_check
    _
  $region7: #{graphsage_forward.4} parent=0 // pred_check_branch
    %13 = sbr.rel (0) target = $region9
  $region8: #{graphsage_forward.4} parent=0 // pred_region
    _
  $region9: #{graphsage_forward.4} parent=0 // pred_fallthru
    _
  // Predicated region
  $region10: #{graphsage_forward.4} parent=0 // pred_check
    _
  $region11: #{graphsage_forward.4} parent=0 // pred_check_branch
    %15 = sbr.rel (0) target = $region13
  $region12: #{graphsage_forward.4} parent=0 // pred_region
    _
  $region13: #{graphsage_forward.4} parent=0 // pred_fallthru
    _
  // Predicated region
  $region14: #{graphsage_forward.4} parent=0 // pred_check
    _
  $region15: #{graphsage_forward.4} parent=0 // pred_check_branch
    %17 = sbr.rel (0) target = $region17
  $region16: #{graphsage_forward.4} parent=0 // pred_region
    _
  $region17: #{graphsage_forward.4} parent=0 // pred_fallthru
    _
  // Predicated region
  $region18: #{graphsage_forward.4} parent=0 // pred_check
    _
  $region19: #{graphsage_forward.4} parent=0 // pred_check_branch
    %19 = sbr.rel (0) target = $region21
  $region20: #{graphsage_forward.4} parent=0 // pred_region
    _
  $region21: #{graphsage_forward.4} parent=0 // pred_fallthru
    _
  %p21 = scmp.eq.s32.totalorder 0, 0
  // Predicated region
  $region22: #{graphsage_forward.4} parent=0 // pred_check
    %p22 = pneg %p21
  $region23: #{graphsage_forward.4} parent=0 // pred_check_branch
    %24 = sbr.rel (%p22) target = $region25
  $region24: #{graphsage_forward.4} parent=0 // pred_region
    %25 = vst [vmem:[#allocation2] sm:$0xff] 0.0
    %26 = vst [vmem:[#allocation2 + $0x8] sm:$0xff] 0.0
    %27 = vst [vmem:[#allocation2 + $0x10] sm:$0xff] 0.0
    %28 = vst [vmem:[#allocation2 + $0x18] sm:$0xff] 0.0
    %29 = vst [vmem:[#allocation2 + $0x20] sm:$0xff] 0.0
    %30 = vst [vmem:[#allocation2 + $0x28] sm:$0xff] 0.0
    %31 = vst [vmem:[#allocation2 + $0x30] sm:$0xff] 0.0
    %32 = vst [vmem:[#allocation2 + $0x38] sm:$0xff] 0.0
    %33 = vst [vmem:[#allocation2 + $0x40] sm:$0xff] 0.0
    %34 = vst [vmem:[#allocation2 + $0x48] sm:$0xff] 0.0
    %35 = vst [vmem:[#allocation2 + $0x50] sm:$0xff] 0.0
    %36 = vst [vmem:[#allocation2 + $0x58] sm:$0xff] 0.0
    %37 = vst [vmem:[#allocation2 + $0x60] sm:$0xff] 0.0
    %38 = vst [vmem:[#allocation2 + $0x68] sm:$0xff] 0.0
    %39 = vst [vmem:[#allocation2 + $0x70] sm:$0xff] 0.0
    %40 = vst [vmem:[#allocation2 + $0x78] sm:$0xff] 0.0
  $region25: #{graphsage_forward.4} parent=0 // pred_fallthru
    _
  %s41 = smul.u32 0, 128
  %s42 = sshra.s32 %s41, 3
  %s43 = sand.u32 %s41, 7
  %s44 = smul.addr %s42, 4
  %s45 = scalar_lea.vmem %s2, %s44
  %v46 = vld [vmem:[%s45] sm:$0xf]
  %v47 = vld [vmem:[%s45 + $0x4] sm:$0xf]
  %v48 = vld [vmem:[%s45 + $0x8] sm:$0xf]
  %v49 = vld [vmem:[%s45 + $0xc] sm:$0xf]
  %v50 = vld [vmem:[%s45 + $0x10] sm:$0xf]
  %v51 = vld [vmem:[%s45 + $0x14] sm:$0xf]
  %v52 = vld [vmem:[%s45 + $0x18] sm:$0xf]
  %v53 = vld [vmem:[%s45 + $0x1c] sm:$0xf]
  %v54 = vld [vmem:[%s45 + $0x20] sm:$0xf]
  %v55 = vld [vmem:[%s45 + $0x24] sm:$0xf]
  %v56 = vld [vmem:[%s45 + $0x28] sm:$0xf]
  %v57 = vld [vmem:[%s45 + $0x2c] sm:$0xf]
  %v58 = vld [vmem:[%s45 + $0x30] sm:$0xf]
  %v59 = vld [vmem:[%s45 + $0x34] sm:$0xf]
  %v60 = vld [vmem:[%s45 + $0x38] sm:$0xf]
  %v61 = vld [vmem:[%s45 + $0x3c] sm:$0xf]
  %v62 = vld [vmem:[#allocation2] sm:$0xff]
  %v63 = vld [vmem:[#allocation2 + $0x8] sm:$0xff]
  %v64 = vld [vmem:[#allocation2 + $0x10] sm:$0xff]
  %v65 = vld [vmem:[#allocation2 + $0x18] sm:$0xff]
  %v66 = vld [vmem:[#allocation2 + $0x20] sm:$0xff]
  %v67 = vld [vmem:[#allocation2 + $0x28] sm:$0xff]
  %v68 = vld [vmem:[#allocation2 + $0x30] sm:$0xff]
  %v69 = vld [vmem:[#allocation2 + $0x38] sm:$0xff]
  %v70 = vld [vmem:[#allocation2 + $0x40] sm:$0xff]
  %v71 = vld [vmem:[#allocation2 + $0x48] sm:$0xff]
  %v72 = vld [vmem:[#allocation2 + $0x50] sm:$0xff]
  %v73 = vld [vmem:[#allocation2 + $0x58] sm:$0xff]
  %v74 = vld [vmem:[#allocation2 + $0x60] sm:$0xff]
  %v75 = vld [vmem:[#allocation2 + $0x68] sm:$0xff]
  %v76 = vld [vmem:[#allocation2 + $0x70] sm:$0xff]
  %v77 = vld [vmem:[#allocation2 + $0x78] sm:$0xff]
  %v78 = vld [vmem:[%s0] sm:$0xf]
  %v79 = vld [vmem:[%s0 + $0x4] sm:$0xf]
  %v80 = vld [vmem:[%s0 + $0x8] sm:$0xf]
  %v81 = vld [vmem:[%s0 + $0xc] sm:$0xf]
  %v82 = vld [vmem:[%s0 + $0x10] sm:$0xf]
  %v83 = vld [vmem:[%s0 + $0x14] sm:$0xf]
  %v84 = vld [vmem:[%s0 + $0x18] sm:$0xf]
  %v85 = vld [vmem:[%s0 + $0x1c] sm:$0xf]
  %v86 = vld [vmem:[%s0 + $0x20] sm:$0xf]
  %v87 = vld [vmem:[%s0 + $0x24] sm:$0xf]
  %v88 = vld [vmem:[%s0 + $0x28] sm:$0xf]
  %v89 = vld [vmem:[%s0 + $0x2c] sm:$0xf]
  %v90 = vld [vmem:[%s0 + $0x30] sm:$0xf]
  %v91 = vld [vmem:[%s0 + $0x34] sm:$0xf]
  %v92 = vld [vmem:[%s0 + $0x38] sm:$0xf]
  %v93 = vld [vmem:[%s0 + $0x3c] sm:$0xf]
  %v110 = vunpack.c.l.b16 %v78
  %v111 = vunpack.c.l.b16 %v79
  %v112 = vunpack.c.l.b16 %v80
  %v113 = vunpack.c.l.b16 %v81
  %v114 = vunpack.c.l.b16 %v82
  %v115 = vunpack.c.l.b16 %v83
  %v116 = vunpack.c.l.b16 %v84
  %v117 = vunpack.c.l.b16 %v85
  %v118 = vunpack.c.l.b16 %v86
  %v119 = vunpack.c.l.b16 %v87
  %v120 = vunpack.c.l.b16 %v88
  %v121 = vunpack.c.l.b16 %v89
  %v122 = vunpack.c.l.b16 %v90
  %v123 = vunpack.c.l.b16 %v91
  %v124 = vunpack.c.l.b16 %v92
  %v125 = vunpack.c.l.b16 %v93
  %v126 = vpack.c.b16 %v111, %v110
  %v127 = vpack.c.b16 %v113, %v112
  %v128 = vpack.c.b16 %v115, %v114
  %v129 = vpack.c.b16 %v117, %v116
  %v130 = vpack.c.b16 %v119, %v118
  %v131 = vpack.c.b16 %v121, %v120
  %v132 = vpack.c.b16 %v123, %v122
  %v133 = vpack.c.b16 %v125, %v124
  %v158 = vunpack.c.l.b16 %v46
  %v159 = vunpack.c.l.b16 %v47
  %v160 = vunpack.c.l.b16 %v48
  %v161 = vunpack.c.l.b16 %v49
  %v162 = vunpack.c.l.b16 %v50
  %v163 = vunpack.c.l.b16 %v51
  %v164 = vunpack.c.l.b16 %v52
  %v165 = vunpack.c.l.b16 %v53
  %v166 = vunpack.c.l.b16 %v54
  %v167 = vunpack.c.l.b16 %v55
  %v168 = vunpack.c.l.b16 %v56
  %v169 = vunpack.c.l.b16 %v57
  %v170 = vunpack.c.l.b16 %v58
  %v171 = vunpack.c.l.b16 %v59
  %v172 = vunpack.c.l.b16 %v60
  %v173 = vunpack.c.l.b16 %v61
  %v174 = vpack.c.b16 %v159, %v158
  %v175 = vpack.c.b16 %v161, %v160
  %v176 = vpack.c.b16 %v163, %v162
  %v177 = vpack.c.b16 %v165, %v164
  %v178 = vpack.c.b16 %v167, %v166
  %v179 = vpack.c.b16 %v169, %v168
  %v180 = vpack.c.b16 %v171, %v170
  %v181 = vpack.c.b16 %v173, %v172
  %190 = vmatprep.subr.bf16.mxu0 0
  %191 = vmatpush1.bf16.msra.mxu0 %v181
  %192 = vmatprep.subr.bf16.mxu0 0
  %193 = vmatpush1.bf16.msra.mxu0 %v180
  %194 = vmatprep.subr.bf16.mxu0 0
  %195 = vmatpush1.bf16.msra.mxu0 %v179
  %196 = vmatprep.subr.bf16.mxu0 0
  %197 = vmatpush1.bf16.msra.mxu0 %v178
  %198 = vmatprep.subr.bf16.mxu0 0
  %199 = vmatpush1.bf16.msra.mxu0 %v177
  %200 = vmatprep.subr.bf16.mxu0 0
  %201 = vmatpush1.bf16.msra.mxu0 %v176
  %202 = vmatprep.subr.bf16.mxu0 0
  %203 = vmatpush1.bf16.msra.mxu0 %v175
  %204 = vmatprep.subr.bf16.mxu0 0
  %205 = vmatpush1.bf16.msra.mxu0 %v174
  %206 = vmatprep.subr.bf16.mxu0 0
  %207 = vmatpush2.bf16.msra.mxu0 0
  %208 = vmatprep.subr.bf16.mxu0 0
  %209 = vmatpush2.bf16.msra.mxu0 0
  %210 = vmatprep.subr.bf16.mxu0 0
  %211 = vmatpush2.bf16.msra.mxu0 0
  %212 = vmatprep.subr.bf16.mxu0 0
  %213 = vmatpush2.bf16.msra.mxu0 0
  %214 = vmatprep.subr.bf16.mxu0 0
  %215 = vmatpush2.bf16.msra.mxu0 0
  %216 = vmatprep.subr.bf16.mxu0 0
  %217 = vmatpush2.bf16.msra.mxu0 0
  %218 = vmatprep.subr.bf16.mxu0 0
  %219 = vmatpush2.bf16.msra.mxu0 0
  %220 = vmatprep.subr.bf16.mxu0 0
  %221 = vmatpush2.bf16.msra.mxu0 0
  %222 = vmatprep.mubr.bf16.mxu0 0
  %223 = vmatmul.mubr.bf16.gmra.mxu0 %v126
  %v224 = vpop.f32.mrf.mxu0
  %v225 = vadd.f32 0.0, %v224
  %v226 = vpop.f32.mrf.mxu0
  %v227 = vpop.f32.mrf.mxu0
  %v228 = vadd.f32 0.0, %v227
  %v229 = vpop.f32.mrf.mxu0
  %230 = vmatprep.mubr.bf16.mxu0 0
  %231 = vmatmul.mubr.bf16.gmra.mxu0 %v127
  %v232 = vpop.f32.mrf.mxu0
  %v233 = vadd.f32 0.0, %v232
  %v234 = vpop.f32.mrf.mxu0
  %v235 = vpop.f32.mrf.mxu0
  %v236 = vadd.f32 0.0, %v235
  %v237 = vpop.f32.mrf.mxu0
  %238 = vmatprep.mubr.bf16.mxu0 0
  %239 = vmatmul.mubr.bf16.gmra.mxu0 %v128
  %v240 = vpop.f32.mrf.mxu0
  %v241 = vadd.f32 0.0, %v240
  %v242 = vpop.f32.mrf.mxu0
  %v243 = vpop.f32.mrf.mxu0
  %v244 = vadd.f32 0.0, %v243
  %v245 = vpop.f32.mrf.mxu0
  %246 = vmatprep.mubr.bf16.mxu0 0
  %247 = vmatmul.mubr.bf16.gmra.mxu0 %v129
  %v248 = vpop.f32.mrf.mxu0
  %v249 = vadd.f32 0.0, %v248
  %v250 = vpop.f32.mrf.mxu0
  %v251 = vpop.f32.mrf.mxu0
  %v252 = vadd.f32 0.0, %v251
  %v253 = vpop.f32.mrf.mxu0
  %254 = vmatprep.mubr.bf16.mxu0 0
  %255 = vmatmul.mubr.bf16.gmra.mxu0 %v130
  %v256 = vpop.f32.mrf.mxu0
  %v257 = vadd.f32 0.0, %v256
  %v258 = vpop.f32.mrf.mxu0
  %v259 = vpop.f32.mrf.mxu0
  %v260 = vadd.f32 0.0, %v259
  %v261 = vpop.f32.mrf.mxu0
  %262 = vmatprep.mubr.bf16.mxu0 0
  %263 = vmatmul.mubr.bf16.gmra.mxu0 %v131
  %v264 = vpop.f32.mrf.mxu0
  %v265 = vadd.f32 0.0, %v264
  %v266 = vpop.f32.mrf.mxu0
  %v267 = vpop.f32.mrf.mxu0
  %v268 = vadd.f32 0.0, %v267
  %v269 = vpop.f32.mrf.mxu0
  %270 = vmatprep.mubr.bf16.mxu0 0
  %271 = vmatmul.mubr.bf16.gmra.mxu0 %v132
  %v272 = vpop.f32.mrf.mxu0
  %v273 = vadd.f32 0.0, %v272
  %v274 = vpop.f32.mrf.mxu0
  %v275 = vpop.f32.mrf.mxu0
  %v276 = vadd.f32 0.0, %v275
  %v277 = vpop.f32.mrf.mxu0
  %278 = vmatprep.mubr.bf16.mxu0 0
  %279 = vmatmul.mubr.bf16.gmra.mxu0 %v133
  %v280 = vpop.f32.mrf.mxu0
  %v281 = vadd.f32 0.0, %v280
  %v282 = vpop.f32.mrf.mxu0
  %v283 = vpop.f32.mrf.mxu0
  %v284 = vadd.f32 0.0, %v283
  %v285 = vpop.f32.mrf.mxu0
  %286 = vdwg.mxu0
  %v287 = vadd.f32 %v62, %v225
  %v288 = vadd.f32 %v63, %v228
  %v289 = vadd.f32 %v64, %v233
  %v290 = vadd.f32 %v65, %v236
  %v291 = vadd.f32 %v66, %v241
  %v292 = vadd.f32 %v67, %v244
  %v293 = vadd.f32 %v68, %v249
  %v294 = vadd.f32 %v69, %v252
  %v295 = vadd.f32 %v70, %v257
  %v296 = vadd.f32 %v71, %v260
  %v297 = vadd.f32 %v72, %v265
  %v298 = vadd.f32 %v73, %v268
  %v299 = vadd.f32 %v74, %v273
  %v300 = vadd.f32 %v75, %v276
  %v301 = vadd.f32 %v76, %v281
  %v302 = vadd.f32 %v77, %v284
  %303 = vst [vmem:[#allocation2] sm:$0xff] %v287
  %304 = vst [vmem:[#allocation2 + $0x8] sm:$0xff] %v288
  %305 = vst [vmem:[#allocation2 + $0x10] sm:$0xff] %v289
  %306 = vst [vmem:[#allocation2 + $0x18] sm:$0xff] %v290
  %307 = vst [vmem:[#allocation2 + $0x20] sm:$0xff] %v291
  %308 = vst [vmem:[#allocation2 + $0x28] sm:$0xff] %v292
  %309 = vst [vmem:[#allocation2 + $0x30] sm:$0xff] %v293
  %310 = vst [vmem:[#allocation2 + $0x38] sm:$0xff] %v294
  %311 = vst [vmem:[#allocation2 + $0x40] sm:$0xff] %v295
  %312 = vst [vmem:[#allocation2 + $0x48] sm:$0xff] %v296
  %313 = vst [vmem:[#allocation2 + $0x50] sm:$0xff] %v297
  %314 = vst [vmem:[#allocation2 + $0x58] sm:$0xff] %v298
  %315 = vst [vmem:[#allocation2 + $0x60] sm:$0xff] %v299
  %316 = vst [vmem:[#allocation2 + $0x68] sm:$0xff] %v300
  %317 = vst [vmem:[#allocation2 + $0x70] sm:$0xff] %v301
  %318 = vst [vmem:[#allocation2 + $0x78] sm:$0xff] %v302
  // Predicated region
  $region26: #{graphsage_forward.4} parent=0 // pred_check
    %p319 = pneg %p21
  $region27: #{graphsage_forward.4} parent=0 // pred_check_branch
    %321 = sbr.rel (%p319) target = $region29
  $region28: #{graphsage_forward.4} parent=0 // pred_region
    %s322 = smul.u32 0, 128
    %s323 = sshra.s32 %s322, 3
    %s324 = sand.u32 %s322, 7
    %s325 = smul.addr %s323, 4
    %s326 = scalar_lea.vmem %s2, %s325
    %v327 = vld [vmem:[%s326] sm:$0xf]
    %v328 = vld [vmem:[%s326 + $0x4] sm:$0xf]
    %v329 = vld [vmem:[%s326 + $0x8] sm:$0xf]
    %v330 = vld [vmem:[%s326 + $0xc] sm:$0xf]
    %v331 = vld [vmem:[%s326 + $0x10] sm:$0xf]
    %v332 = vld [vmem:[%s326 + $0x14] sm:$0xf]
    %v333 = vld [vmem:[%s326 + $0x18] sm:$0xf]
    %v334 = vld [vmem:[%s326 + $0x1c] sm:$0xf]
    %v335 = vld [vmem:[%s326 + $0x20] sm:$0xf]
    %v336 = vld [vmem:[%s326 + $0x24] sm:$0xf]
    %v337 = vld [vmem:[%s326 + $0x28] sm:$0xf]
    %v338 = vld [vmem:[%s326 + $0x2c] sm:$0xf]
    %v339 = vld [vmem:[%s326 + $0x30] sm:$0xf]
    %v340 = vld [vmem:[%s326 + $0x34] sm:$0xf]
    %v341 = vld [vmem:[%s326 + $0x38] sm:$0xf]
    %v342 = vld [vmem:[%s326 + $0x3c] sm:$0xf]
    %v343 = vld [vmem:[#allocation2] sm:$0xff]
    %v344 = vld [vmem:[#allocation2 + $0x8] sm:$0xff]
    %v345 = vld [vmem:[#allocation2 + $0x10] sm:$0xff]
    %v346 = vld [vmem:[#allocation2 + $0x18] sm:$0xff]
    %v347 = vld [vmem:[#allocation2 + $0x20] sm:$0xff]
    %v348 = vld [vmem:[#allocation2 + $0x28] sm:$0xff]
    %v349 = vld [vmem:[#allocation2 + $0x30] sm:$0xff]
    %v350 = vld [vmem:[#allocation2 + $0x38] sm:$0xff]
    %v351 = vld [vmem:[#allocation2 + $0x40] sm:$0xff]
    %v352 = vld [vmem:[#allocation2 + $0x48] sm:$0xff]
    %v353 = vld [vmem:[#allocation2 + $0x50] sm:$0xff]
    %v354 = vld [vmem:[#allocation2 + $0x58] sm:$0xff]
    %v355 = vld [vmem:[#allocation2 + $0x60] sm:$0xff]
    %v356 = vld [vmem:[#allocation2 + $0x68] sm:$0xff]
    %v357 = vld [vmem:[#allocation2 + $0x70] sm:$0xff]
    %v358 = vld [vmem:[#allocation2 + $0x78] sm:$0xff]
    %v359 = vld [vmem:[%s1] sm:$0xff]
    %v360 = vld [vmem:[%s1 + $0x8] sm:$0xff]
    %v361 = vld [vmem:[%s1 + $0x10] sm:$0xff]
    %v362 = vld [vmem:[%s1 + $0x18] sm:$0xff]
    %v363 = vld [vmem:[%s1 + $0x20] sm:$0xff]
    %v364 = vld [vmem:[%s1 + $0x28] sm:$0xff]
    %v365 = vld [vmem:[%s1 + $0x30] sm:$0xff]
    %v366 = vld [vmem:[%s1 + $0x38] sm:$0xff]
    %v367 = vld [vmem:[%s1 + $0x40] sm:$0xff]
    %v368 = vld [vmem:[%s1 + $0x48] sm:$0xff]
    %v369 = vld [vmem:[%s1 + $0x50] sm:$0xff]
    %v370 = vld [vmem:[%s1 + $0x58] sm:$0xff]
    %v371 = vld [vmem:[%s1 + $0x60] sm:$0xff]
    %v372 = vld [vmem:[%s1 + $0x68] sm:$0xff]
    %v373 = vld [vmem:[%s1 + $0x70] sm:$0xff]
    %v374 = vld [vmem:[%s1 + $0x78] sm:$0xff]
    %v375 = vld [vmem:[%s3] sm:$0xf]
    %v376 = vld [vmem:[%s3 + $0x4] sm:$0xf]
    %v377 = vld [vmem:[%s3 + $0x8] sm:$0xf]
    %v378 = vld [vmem:[%s3 + $0xc] sm:$0xf]
    %v379 = vld [vmem:[%s3 + $0x10] sm:$0xf]
    %v380 = vld [vmem:[%s3 + $0x14] sm:$0xf]
    %v381 = vld [vmem:[%s3 + $0x18] sm:$0xf]
    %v382 = vld [vmem:[%s3 + $0x1c] sm:$0xf]
    %v383 = vld [vmem:[%s3 + $0x20] sm:$0xf]
    %v384 = vld [vmem:[%s3 + $0x24] sm:$0xf]
    %v385 = vld [vmem:[%s3 + $0x28] sm:$0xf]
    %v386 = vld [vmem:[%s3 + $0x2c] sm:$0xf]
    %v387 = vld [vmem:[%s3 + $0x30] sm:$0xf]
    %v388 = vld [vmem:[%s3 + $0x34] sm:$0xf]
    %v389 = vld [vmem:[%s3 + $0x38] sm:$0xf]
    %v390 = vld [vmem:[%s3 + $0x3c] sm:$0xf]
    %v391 = vld [vmem:[%s3 + $0x40] sm:$0xf]
    %v392 = vld [vmem:[%s3 + $0x44] sm:$0xf]
    %v393 = vld [vmem:[%s3 + $0x48] sm:$0xf]
    %v394 = vld [vmem:[%s3 + $0x4c] sm:$0xf]
    %v395 = vld [vmem:[%s3 + $0x50] sm:$0xf]
    %v396 = vld [vmem:[%s3 + $0x54] sm:$0xf]
    %v397 = vld [vmem:[%s3 + $0x58] sm:$0xf]
    %v398 = vld [vmem:[%s3 + $0x5c] sm:$0xf]
    %v399 = vld [vmem:[%s3 + $0x60] sm:$0xf]
    %v400 = vld [vmem:[%s3 + $0x64] sm:$0xf]
    %v401 = vld [vmem:[%s3 + $0x68] sm:$0xf]
    %v402 = vld [vmem:[%s3 + $0x6c] sm:$0xf]
    %v403 = vld [vmem:[%s3 + $0x70] sm:$0xf]
    %v404 = vld [vmem:[%s3 + $0x74] sm:$0xf]
    %v405 = vld [vmem:[%s3 + $0x78] sm:$0xf]
    %v406 = vld [vmem:[%s3 + $0x7c] sm:$0xf]
    %v407 = vld [vmem:[%s4] sm:$0x1]
    %409 = vset.pattern.permute.xlu0 0
    %410 = vperm.xlu0 %409, %v359
    %v411 = vpop.permute.xlu0 %410
    %414 = vset.pattern.permute.xlu0 0
    %415 = vperm.xlu0 %414, %v360
    %v416 = vpop.permute.xlu0 %415
    %419 = vset.pattern.permute.xlu0 0
    %420 = vperm.xlu0 %419, %v361
    %v421 = vpop.permute.xlu0 %420
    %424 = vset.pattern.permute.xlu0 0
    %425 = vperm.xlu0 %424, %v362
    %v426 = vpop.permute.xlu0 %425
    %429 = vset.pattern.permute.xlu0 0
    %430 = vperm.xlu0 %429, %v363
    %v431 = vpop.permute.xlu0 %430
    %434 = vset.pattern.permute.xlu0 0
    %435 = vperm.xlu0 %434, %v364
    %v436 = vpop.permute.xlu0 %435
    %439 = vset.pattern.permute.xlu0 0
    %440 = vperm.xlu0 %439, %v365
    %v441 = vpop.permute.xlu0 %440
    %444 = vset.pattern.permute.xlu0 0
    %445 = vperm.xlu0 %444, %v366
    %v446 = vpop.permute.xlu0 %445
    %449 = vset.pattern.permute.xlu0 0
    %450 = vperm.xlu0 %449, %v367
    %v451 = vpop.permute.xlu0 %450
    %454 = vset.pattern.permute.xlu0 0
    %455 = vperm.xlu0 %454, %v368
    %v456 = vpop.permute.xlu0 %455
    %459 = vset.pattern.permute.xlu0 0
    %460 = vperm.xlu0 %459, %v369
    %v461 = vpop.permute.xlu0 %460
    %464 = vset.pattern.permute.xlu0 0
    %465 = vperm.xlu0 %464, %v370
    %v466 = vpop.permute.xlu0 %465
    %469 = vset.pattern.permute.xlu0 0
    %470 = vperm.xlu0 %469, %v371
    %v471 = vpop.permute.xlu0 %470
    %474 = vset.pattern.permute.xlu0 0
    %475 = vperm.xlu0 %474, %v372
    %v476 = vpop.permute.xlu0 %475
    %479 = vset.pattern.permute.xlu0 0
    %480 = vperm.xlu0 %479, %v373
    %v481 = vpop.permute.xlu0 %480
    %484 = vset.pattern.permute.xlu0 0
    %485 = vperm.xlu0 %484, %v374
    %v486 = vpop.permute.xlu0 %485
    %v488 = vmul.f32 %v343, %v411
    %v489 = vmul.f32 %v344, %v416
    %v490 = vmul.f32 %v345, %v421
    %v491 = vmul.f32 %v346, %v426
    %v492 = vmul.f32 %v347, %v431
    %v493 = vmul.f32 %v348, %v436
    %v494 = vmul.f32 %v349, %v441
    %v495 = vmul.f32 %v350, %v446
    %v496 = vmul.f32 %v351, %v451
    %v497 = vmul.f32 %v352, %v456
    %v498 = vmul.f32 %v353, %v461
    %v499 = vmul.f32 %v354, %v466
    %v500 = vmul.f32 %v355, %v471
    %v501 = vmul.f32 %v356, %v476
    %v502 = vmul.f32 %v357, %v481
    %v503 = vmul.f32 %v358, %v486
    %v504 = vpack.c.bf16 %v489, %v488
    %v505 = vpack.c.bf16 %v491, %v490
    %v506 = vpack.c.bf16 %v493, %v492
    %v507 = vpack.c.bf16 %v495, %v494
    %v508 = vpack.c.bf16 %v497, %v496
    %v509 = vpack.c.bf16 %v499, %v498
    %v510 = vpack.c.bf16 %v501, %v500
    %v511 = vpack.c.bf16 %v503, %v502
    %v528 = vunpack.c.l.b16 %v327
    %v529 = vunpack.c.l.b16 %v328
    %v530 = vunpack.c.l.b16 %v329
    %v531 = vunpack.c.l.b16 %v330
    %v532 = vunpack.c.l.b16 %v331
    %v533 = vunpack.c.l.b16 %v332
    %v534 = vunpack.c.l.b16 %v333
    %v535 = vunpack.c.l.b16 %v334
    %v536 = vunpack.c.l.b16 %v335
    %v537 = vunpack.c.l.b16 %v336
    %v538 = vunpack.c.l.b16 %v337
    %v539 = vunpack.c.l.b16 %v338
    %v540 = vunpack.c.l.b16 %v339
    %v541 = vunpack.c.l.b16 %v340
    %v542 = vunpack.c.l.b16 %v341
    %v543 = vunpack.c.l.b16 %v342
    %v544 = vpack.c.b16 %v529, %v528
    %v545 = vpack.c.b16 %v531, %v530
    %v546 = vpack.c.b16 %v533, %v532
    %v547 = vpack.c.b16 %v535, %v534
    %v548 = vpack.c.b16 %v537, %v536
    %v549 = vpack.c.b16 %v539, %v538
    %v550 = vpack.c.b16 %v541, %v540
    %v551 = vpack.c.b16 %v543, %v542
    %v561 = vlaneseq
    %v562 = vshrl.u32 %v561, 7
    %v563 = vsub.s32 0, %v562
    %v564 = vrot.slane %v407, %v563
    %v598 = vunpack.c.l.b16 %v375
    %v599 = vunpack.c.l.b16 %v376
    %v600 = vunpack.c.l.b16 %v377
    %v601 = vunpack.c.l.b16 %v378
    %v602 = vunpack.c.l.b16 %v379
    %v603 = vunpack.c.l.b16 %v380
    %v604 = vunpack.c.l.b16 %v381
    %v605 = vunpack.c.l.b16 %v382
    %v606 = vunpack.c.l.b16 %v383
    %v607 = vunpack.c.l.b16 %v384
    %v608 = vunpack.c.l.b16 %v385
    %v609 = vunpack.c.l.b16 %v386
    %v610 = vunpack.c.l.b16 %v387
    %v611 = vunpack.c.l.b16 %v388
    %v612 = vunpack.c.l.b16 %v389
    %v613 = vunpack.c.l.b16 %v390
    %v614 = vunpack.c.l.b16 %v391
    %v615 = vunpack.c.l.b16 %v392
    %v616 = vunpack.c.l.b16 %v393
    %v617 = vunpack.c.l.b16 %v394
    %v618 = vunpack.c.l.b16 %v395
    %v619 = vunpack.c.l.b16 %v396
    %v620 = vunpack.c.l.b16 %v397
    %v621 = vunpack.c.l.b16 %v398
    %v622 = vunpack.c.l.b16 %v399
    %v623 = vunpack.c.l.b16 %v400
    %v624 = vunpack.c.l.b16 %v401
    %v625 = vunpack.c.l.b16 %v402
    %v626 = vunpack.c.l.b16 %v403
    %v627 = vunpack.c.l.b16 %v404
    %v628 = vunpack.c.l.b16 %v405
    %v629 = vunpack.c.l.b16 %v406
    %v630 = vpack.c.b16 %v599, %v598
    %v631 = vpack.c.b16 %v601, %v600
    %v632 = vpack.c.b16 %v603, %v602
    %v633 = vpack.c.b16 %v605, %v604
    %v634 = vpack.c.b16 %v607, %v606
    %v635 = vpack.c.b16 %v609, %v608
    %v636 = vpack.c.b16 %v611, %v610
    %v637 = vpack.c.b16 %v613, %v612
    %v638 = vpack.c.b16 %v615, %v614
    %v639 = vpack.c.b16 %v617, %v616
    %v640 = vpack.c.b16 %v619, %v618
    %v641 = vpack.c.b16 %v621, %v620
    %v642 = vpack.c.b16 %v623, %v622
    %v643 = vpack.c.b16 %v625, %v624
    %v644 = vpack.c.b16 %v627, %v626
    %v645 = vpack.c.b16 %v629, %v628
    %662 = vmatprep.subr.bf16.mxu0 0
    %663 = vmatpush1.bf16.msra.mxu0 %v637
    %664 = vmatprep.subr.bf16.mxu0 0
    %665 = vmatpush1.bf16.msra.mxu0 %v636
    %666 = vmatprep.subr.bf16.mxu0 0
    %667 = vmatpush1.bf16.msra.mxu0 %v635
    %668 = vmatprep.subr.bf16.mxu0 0
    %669 = vmatpush1.bf16.msra.mxu0 %v634
    %670 = vmatprep.subr.bf16.mxu0 0
    %671 = vmatpush1.bf16.msra.mxu0 %v633
    %672 = vmatprep.subr.bf16.mxu0 0
    %673 = vmatpush1.bf16.msra.mxu0 %v632
    %674 = vmatprep.subr.bf16.mxu0 0
    %675 = vmatpush1.bf16.msra.mxu0 %v631
    %676 = vmatprep.subr.bf16.mxu0 0
    %677 = vmatpush1.bf16.msra.mxu0 %v630
    %678 = vmatprep.subr.bf16.mxu0 0
    %679 = vmatpush2.bf16.msra.mxu0 %v645
    %680 = vmatprep.subr.bf16.mxu0 0
    %681 = vmatpush2.bf16.msra.mxu0 %v644
    %682 = vmatprep.subr.bf16.mxu0 0
    %683 = vmatpush2.bf16.msra.mxu0 %v643
    %684 = vmatprep.subr.bf16.mxu0 0
    %685 = vmatpush2.bf16.msra.mxu0 %v642
    %686 = vmatprep.subr.bf16.mxu0 0
    %687 = vmatpush2.bf16.msra.mxu0 %v641
    %688 = vmatprep.subr.bf16.mxu0 0
    %689 = vmatpush2.bf16.msra.mxu0 %v640
    %690 = vmatprep.subr.bf16.mxu0 0
    %691 = vmatpush2.bf16.msra.mxu0 %v639
    %692 = vmatprep.subr.bf16.mxu0 0
    %693 = vmatpush2.bf16.msra.mxu0 %v638
    %694 = vmatprep.mubr.bf16.mxu0 %v544
    %695 = vmatmul.mubr.bf16.gmra.mxu0 %v504
    %v696 = vpop.f32.mrf.mxu0
    %v697 = vadd.f32 %v564, %v696
    %v698 = vpop.f32.mrf.mxu0
    %v699 = vpop.f32.mrf.mxu0
    %v700 = vadd.f32 %v564, %v699
    %v701 = vpop.f32.mrf.mxu0
    %702 = vmatprep.mubr.bf16.mxu0 %v545
    %703 = vmatmul.mubr.bf16.gmra.mxu0 %v505
    %v704 = vpop.f32.mrf.mxu0
    %v705 = vadd.f32 %v564, %v704
    %v706 = vpop.f32.mrf.mxu0
    %v707 = vpop.f32.mrf.mxu0
    %v708 = vadd.f32 %v564, %v707
    %v709 = vpop.f32.mrf.mxu0
    %710 = vmatprep.mubr.bf16.mxu0 %v546
    %711 = vmatmul.mubr.bf16.gmra.mxu0 %v506
    %v712 = vpop.f32.mrf.mxu0
    %v713 = vadd.f32 %v564, %v712
    %v714 = vpop.f32.mrf.mxu0
    %v715 = vpop.f32.mrf.mxu0
    %v716 = vadd.f32 %v564, %v715
    %v717 = vpop.f32.mrf.mxu0
    %718 = vmatprep.mubr.bf16.mxu0 %v547
    %719 = vmatmul.mubr.bf16.gmra.mxu0 %v507
    %v720 = vpop.f32.mrf.mxu0
    %v721 = vadd.f32 %v564, %v720
    %v722 = vpop.f32.mrf.mxu0
    %v723 = vpop.f32.mrf.mxu0
    %v724 = vadd.f32 %v564, %v723
    %v725 = vpop.f32.mrf.mxu0
    %726 = vmatprep.mubr.bf16.mxu0 %v548
    %727 = vmatmul.mubr.bf16.gmra.mxu0 %v508
    %v728 = vpop.f32.mrf.mxu0
    %v729 = vadd.f32 %v564, %v728
    %v730 = vpop.f32.mrf.mxu0
    %v731 = vpop.f32.mrf.mxu0
    %v732 = vadd.f32 %v564, %v731
    %v733 = vpop.f32.mrf.mxu0
    %734 = vmatprep.mubr.bf16.mxu0 %v549
    %735 = vmatmul.mubr.bf16.gmra.mxu0 %v509
    %v736 = vpop.f32.mrf.mxu0
    %v737 = vadd.f32 %v564, %v736
    %v738 = vpop.f32.mrf.mxu0
    %v739 = vpop.f32.mrf.mxu0
    %v740 = vadd.f32 %v564, %v739
    %v741 = vpop.f32.mrf.mxu0
    %742 = vmatprep.mubr.bf16.mxu0 %v550
    %743 = vmatmul.mubr.bf16.gmra.mxu0 %v510
    %v744 = vpop.f32.mrf.mxu0
    %v745 = vadd.f32 %v564, %v744
    %v746 = vpop.f32.mrf.mxu0
    %v747 = vpop.f32.mrf.mxu0
    %v748 = vadd.f32 %v564, %v747
    %v749 = vpop.f32.mrf.mxu0
    %750 = vmatprep.mubr.bf16.mxu0 %v551
    %751 = vmatmul.mubr.bf16.gmra.mxu0 %v511
    %v752 = vpop.f32.mrf.mxu0
    %v753 = vadd.f32 %v564, %v752
    %v754 = vpop.f32.mrf.mxu0
    %v755 = vpop.f32.mrf.mxu0
    %v756 = vadd.f32 %v564, %v755
    %v757 = vpop.f32.mrf.mxu0
    %758 = vdwg.mxu0
    %v759 = vmax.f32 %v697, 0.0
    %v760 = vmax.f32 %v700, 0.0
    %v761 = vmax.f32 %v705, 0.0
    %v762 = vmax.f32 %v708, 0.0
    %v763 = vmax.f32 %v713, 0.0
    %v764 = vmax.f32 %v716, 0.0
    %v765 = vmax.f32 %v721, 0.0
    %v766 = vmax.f32 %v724, 0.0
    %v767 = vmax.f32 %v729, 0.0
    %v768 = vmax.f32 %v732, 0.0
    %v769 = vmax.f32 %v737, 0.0
    %v770 = vmax.f32 %v740, 0.0
    %v771 = vmax.f32 %v745, 0.0
    %v772 = vmax.f32 %v748, 0.0
    %v773 = vmax.f32 %v753, 0.0
    %v774 = vmax.f32 %v756, 0.0
    %v775 = vpack.c.bf16 %v760, %v759
    %v776 = vpack.c.bf16 %v762, %v761
    %v777 = vpack.c.bf16 %v764, %v763
    %v778 = vpack.c.bf16 %v766, %v765
    %v779 = vpack.c.bf16 %v768, %v767
    %v780 = vpack.c.bf16 %v770, %v769
    %v781 = vpack.c.bf16 %v772, %v771
    %v782 = vpack.c.bf16 %v774, %v773
    %v791 = vunpack.c.l.b16 %v775
    %v792 = vunpack.c.h.b16 %v775
    %v793 = vunpack.c.l.b16 %v776
    %v794 = vunpack.c.h.b16 %v776
    %v795 = vunpack.c.l.b16 %v777
    %v796 = vunpack.c.h.b16 %v777
    %v797 = vunpack.c.l.b16 %v778
    %v798 = vunpack.c.h.b16 %v778
    %v799 = vunpack.c.l.b16 %v779
    %v800 = vunpack.c.h.b16 %v779
    %v801 = vunpack.c.l.b16 %v780
    %v802 = vunpack.c.h.b16 %v780
    %v803 = vunpack.c.l.b16 %v781
    %v804 = vunpack.c.h.b16 %v781
    %v805 = vunpack.c.l.b16 %v782
    %v806 = vunpack.c.h.b16 %v782
    %v807 = vpack.c.b16 %v791, %v791
    %v808 = vpack.c.b16 %v792, %v792
    %v809 = vpack.c.b16 %v793, %v793
    %v810 = vpack.c.b16 %v794, %v794
    %v811 = vpack.c.b16 %v795, %v795
    %v812 = vpack.c.b16 %v796, %v796
    %v813 = vpack.c.b16 %v797, %v797
    %v814 = vpack.c.b16 %v798, %v798
    %v815 = vpack.c.b16 %v799, %v799
    %v816 = vpack.c.b16 %v800, %v800
    %v817 = vpack.c.b16 %v801, %v801
    %v818 = vpack.c.b16 %v802, %v802
    %v819 = vpack.c.b16 %v803, %v803
    %v820 = vpack.c.b16 %v804, %v804
    %v821 = vpack.c.b16 %v805, %v805
    %v822 = vpack.c.b16 %v806, %v806
    %839 = vst [vmem:[%s5] sm:$0xf] %v807
    %840 = vst [vmem:[%s5 + $0x4] sm:$0xf] %v808
    %841 = vst [vmem:[%s5 + $0x8] sm:$0xf] %v809
    %842 = vst [vmem:[%s5 + $0xc] sm:$0xf] %v810
    %843 = vst [vmem:[%s5 + $0x10] sm:$0xf] %v811
    %844 = vst [vmem:[%s5 + $0x14] sm:$0xf] %v812
    %845 = vst [vmem:[%s5 + $0x18] sm:$0xf] %v813
    %846 = vst [vmem:[%s5 + $0x1c] sm:$0xf] %v814
    %847 = vst [vmem:[%s5 + $0x20] sm:$0xf] %v815
    %848 = vst [vmem:[%s5 + $0x24] sm:$0xf] %v816
    %849 = vst [vmem:[%s5 + $0x28] sm:$0xf] %v817
    %850 = vst [vmem:[%s5 + $0x2c] sm:$0xf] %v818
    %851 = vst [vmem:[%s5 + $0x30] sm:$0xf] %v819
    %852 = vst [vmem:[%s5 + $0x34] sm:$0xf] %v820
    %853 = vst [vmem:[%s5 + $0x38] sm:$0xf] %v821
    %854 = vst [vmem:[%s5 + $0x3c] sm:$0xf] %v822
  $region29: #{graphsage_forward.4} parent=0 // pred_fallthru
    _
  // Predicated region
  $region30: #{graphsage_forward.4} parent=0 // pred_check
    _
  $region31: #{graphsage_forward.4} parent=0 // pred_check_branch
    %856 = sbr.rel (0) target = $region33
  $region32: #{graphsage_forward.4} parent=0 // pred_region
    _
  $region33: #{graphsage_forward.4} parent=0 // pred_fallthru
    _
  // Predicated region
  $region34: #{graphsage_forward.4} parent=0 // pred_check
    _
  $region35: #{graphsage_forward.4} parent=0 // pred_check_branch
    %858 = sbr.rel (0) target = $region37
  $region36: #{graphsage_forward.4} parent=0 // pred_region
    _
  $region37: #{graphsage_forward.4} parent=0 // pred_fallthru
    _

// kernel: graphsage_forward.3
$region0: #{graphsage_forward.3}
  #allocation0 [shape = 'u32[]', space=smem, size = 0x4, offset = 0x4, fixed_abs, tag = 'smem constant byte address 0x4 - core index']
  #allocation1 [shape = 'u32[144,128]{1,0:T(1,128)}', space=vmem, size = 0x12000, scoped, tag = 'internal scratch']
  #allocation2 [shape = 'f32[128,128]{1,0:T(8,128)}', space=vmem, size = 0x10000, scoped, tag = 'scratch operand']
  %s0 = inlined_call_operand.vmem [shape: bf16[128,128], index: 0, kind: input, shape index: {}]
  %s1 = inlined_call_operand.vmem [shape: f32[128,1], index: 1, kind: input, shape index: {}]
  %s2 = inlined_call_operand.vmem [shape: bf16[128,128], index: 2, kind: input, shape index: {}]
  %s3 = inlined_call_operand.hbm [shape: bf16[256,128], index: 3, kind: input, shape index: {}]
  %s4 = inlined_call_operand.vmem [shape: f32[1,128], index: 4, kind: input, shape index: {}]
  %s5 = inlined_call_operand.vmem [shape: bf16[128,128], index: 5, kind: output, shape index: {}]
  %s6 = sld [smem:[#allocation0]]
  $region42: #{graphsage_forward.3} parent=0
    _
  %s8 = ssub.s32 1, %s6
  %s9 = scalar_select 0, %s8, %s6
  $region1: #{graphsage_forward.3} parent=0
    #allocation3 [shape = 'u8[65536]{0}', space=vmem, size = 0x10000, scoped, tag = 'input window, operand 3, single buffered']
    #allocation4 [shape = 's32[1]{0}', space=sflag, size = 0x4, scoped, tag = 'scoped memory for graphsage_forward.3']
    %10 = vsyncpa [#allocation4], 0
    // Predicated region
    $region2: #{graphsage_forward.3} parent=1 // pred_check
      _
    $region3: #{graphsage_forward.3} parent=1 // pred_check_branch
      %12 = sbr.rel (0) target = $region5
    $region4: #{graphsage_forward.3} parent=1 // pred_region
      _
    $region5: #{graphsage_forward.3} parent=1 // pred_fallthru
      _
    // Predicated region
    $region6: #{graphsage_forward.3} parent=1 // pred_check
      _
    $region7: #{graphsage_forward.3} parent=1 // pred_check_branch
      %14 = sbr.rel (0) target = $region9
    $region8: #{graphsage_forward.3} parent=1 // pred_region
      _
    $region9: #{graphsage_forward.3} parent=1 // pred_fallthru
      _
    // Predicated region
    $region10: #{graphsage_forward.3} parent=1 // pred_check
      _
    $region11: #{graphsage_forward.3} parent=1 // pred_check_branch
      %16 = sbr.rel (0) target = $region13
    $region12: #{graphsage_forward.3} parent=1 // pred_region
      _
    $region13: #{graphsage_forward.3} parent=1 // pred_fallthru
      _
    // Predicated region
    $region14: #{graphsage_forward.3} parent=1 // pred_check
      _
    $region15: #{graphsage_forward.3} parent=1 // pred_check_branch
      %18 = sbr.rel (0) target = $region17
    $region16: #{graphsage_forward.3} parent=1 // pred_region
      %s20 = ssub.s32 2048, 2048
      %21 = vsyncadd [#allocation4], %s20
      %s22 = sshll.u32 [#allocation3], 4
      %s23 = int_to_ptr.vmem [resolvable:$true] %s22
      %28 = dma.hbm_to_vmem [thread:$0]  %s3, 2048, %s23, [#allocation4], 64, 64, 4
    $region17: #{graphsage_forward.3} parent=1 // pred_fallthru
      _
    // Predicated region
    $region18: #{graphsage_forward.3} parent=1 // pred_check
      _
    $region19: #{graphsage_forward.3} parent=1 // pred_check_branch
      %30 = sbr.rel (0) target = $region21
    $region20: #{graphsage_forward.3} parent=1 // pred_region
      _
    $region21: #{graphsage_forward.3} parent=1 // pred_fallthru
      _
    // Predicated region
    $region22: #{graphsage_forward.3} parent=1 // pred_check
      _
    $region23: #{graphsage_forward.3} parent=1 // pred_check_branch
      %32 = sbr.rel (0) target = $region25
    $region24: #{graphsage_forward.3} parent=1 // pred_region
      %33 = dma.done [#allocation4], 2048
    $region25: #{graphsage_forward.3} parent=1 // pred_fallthru
      _
    %p35 = scmp.eq.s32.totalorder 0, 0
    // Predicated region
    $region26: #{graphsage_forward.3} parent=1 // pred_check
      %p36 = pneg %p35
    $region27: #{graphsage_forward.3} parent=1 // pred_check_branch
      %38 = sbr.rel (%p36) target = $region29
    $region28: #{graphsage_forward.3} parent=1 // pred_region
      %39 = vst [vmem:[#allocation2] sm:$0xff] 0.0
      %40 = vst [vmem:[#allocation2 + $0x8] sm:$0xff] 0.0
      %41 = vst [vmem:[#allocation2 + $0x10] sm:$0xff] 0.0
      %42 = vst [vmem:[#allocation2 + $0x18] sm:$0xff] 0.0
      %43 = vst [vmem:[#allocation2 + $0x20] sm:$0xff] 0.0
      %44 = vst [vmem:[#allocation2 + $0x28] sm:$0xff] 0.0
      %45 = vst [vmem:[#allocation2 + $0x30] sm:$0xff] 0.0
      %46 = vst [vmem:[#allocation2 + $0x38] sm:$0xff] 0.0
      %47 = vst [vmem:[#allocation2 + $0x40] sm:$0xff] 0.0
      %48 = vst [vmem:[#allocation2 + $0x48] sm:$0xff] 0.0
      %49 = vst [vmem:[#allocation2 + $0x50] sm:$0xff] 0.0
      %50 = vst [vmem:[#allocation2 + $0x58] sm:$0xff] 0.0
      %51 = vst [vmem:[#allocation2 + $0x60] sm:$0xff] 0.0
      %52 = vst [vmem:[#allocation2 + $0x68] sm:$0xff] 0.0
      %53 = vst [vmem:[#allocation2 + $0x70] sm:$0xff] 0.0
      %54 = vst [vmem:[#allocation2 + $0x78] sm:$0xff] 0.0
    $region29: #{graphsage_forward.3} parent=1 // pred_fallthru
      _
    %s55 = smul.u32 0, 128
    %s56 = sshra.s32 %s55, 3
    %s57 = sand.u32 %s55, 7
    %s58 = smul.addr %s56, 4
    %s59 = scalar_lea.vmem %s2, %s58
    %v60 = vld [vmem:[%s59] sm:$0xf]
    %v61 = vld [vmem:[%s59 + $0x4] sm:$0xf]
    %v62 = vld [vmem:[%s59 + $0x8] sm:$0xf]
    %v63 = vld [vmem:[%s59 + $0xc] sm:$0xf]
    %v64 = vld [vmem:[%s59 + $0x10] sm:$0xf]
    %v65 = vld [vmem:[%s59 + $0x14] sm:$0xf]
    %v66 = vld [vmem:[%s59 + $0x18] sm:$0xf]
    %v67 = vld [vmem:[%s59 + $0x1c] sm:$0xf]
    %v68 = vld [vmem:[%s59 + $0x20] sm:$0xf]
    %v69 = vld [vmem:[%s59 + $0x24] sm:$0xf]
    %v70 = vld [vmem:[%s59 + $0x28] sm:$0xf]
    %v71 = vld [vmem:[%s59 + $0x2c] sm:$0xf]
    %v72 = vld [vmem:[%s59 + $0x30] sm:$0xf]
    %v73 = vld [vmem:[%s59 + $0x34] sm:$0xf]
    %v74 = vld [vmem:[%s59 + $0x38] sm:$0xf]
    %v75 = vld [vmem:[%s59 + $0x3c] sm:$0xf]
    %v76 = vld [vmem:[#allocation2] sm:$0xff]
    %v77 = vld [vmem:[#allocation2 + $0x8] sm:$0xff]
    %v78 = vld [vmem:[#allocation2 + $0x10] sm:$0xff]
    %v79 = vld [vmem:[#allocation2 + $0x18] sm:$0xff]
    %v80 = vld [vmem:[#allocation2 + $0x20] sm:$0xff]
    %v81 = vld [vmem:[#allocation2 + $0x28] sm:$0xff]
    %v82 = vld [vmem:[#allocation2 + $0x30] sm:$0xff]
    %v83 = vld [vmem:[#allocation2 + $0x38] sm:$0xff]
    %v84 = vld [vmem:[#allocation2 + $0x40] sm:$0xff]
    %v85 = vld [vmem:[#allocation2 + $0x48] sm:$0xff]
    %v86 = vld [vmem:[#allocation2 + $0x50] sm:$0xff]
    %v87 = vld [vmem:[#allocation2 + $0x58] sm:$0xff]
    %v88 = vld [vmem:[#allocation2 + $0x60] sm:$0xff]
    %v89 = vld [vmem:[#allocation2 + $0x68] sm:$0xff]
    %v90 = vld [vmem:[#allocation2 + $0x70] sm:$0xff]
    %v91 = vld [vmem:[#allocation2 + $0x78] sm:$0xff]
    %v92 = vld [vmem:[%s0] sm:$0xf]
    %v93 = vld [vmem:[%s0 + $0x4] sm:$0xf]
    %v94 = vld [vmem:[%s0 + $0x8] sm:$0xf]
    %v95 = vld [vmem:[%s0 + $0xc] sm:$0xf]
    %v96 = vld [vmem:[%s0 + $0x10] sm:$0xf]
    %v97 = vld [vmem:[%s0 + $0x14] sm:$0xf]
    %v98 = vld [vmem:[%s0 + $0x18] sm:$0xf]
    %v99 = vld [vmem:[%s0 + $0x1c] sm:$0xf]
    %v100 = vld [vmem:[%s0 + $0x20] sm:$0xf]
    %v101 = vld [vmem:[%s0 + $0x24] sm:$0xf]
    %v102 = vld [vmem:[%s0 + $0x28] sm:$0xf]
    %v103 = vld [vmem:[%s0 + $0x2c] sm:$0xf]
    %v104 = vld [vmem:[%s0 + $0x30] sm:$0xf]
    %v105 = vld [vmem:[%s0 + $0x34] sm:$0xf]
    %v106 = vld [vmem:[%s0 + $0x38] sm:$0xf]
    %v107 = vld [vmem:[%s0 + $0x3c] sm:$0xf]
    %v124 = vunpack.c.l.b16 %v92
    %v125 = vunpack.c.l.b16 %v93
    %v126 = vunpack.c.l.b16 %v94
    %v127 = vunpack.c.l.b16 %v95
    %v128 = vunpack.c.l.b16 %v96
    %v129 = vunpack.c.l.b16 %v97
    %v130 = vunpack.c.l.b16 %v98
    %v131 = vunpack.c.l.b16 %v99
    %v132 = vunpack.c.l.b16 %v100
    %v133 = vunpack.c.l.b16 %v101
    %v134 = vunpack.c.l.b16 %v102
    %v135 = vunpack.c.l.b16 %v103
    %v136 = vunpack.c.l.b16 %v104
    %v137 = vunpack.c.l.b16 %v105
    %v138 = vunpack.c.l.b16 %v106
    %v139 = vunpack.c.l.b16 %v107
    %v140 = vpack.c.b16 %v125, %v124
    %v141 = vpack.c.b16 %v127, %v126
    %v142 = vpack.c.b16 %v129, %v128
    %v143 = vpack.c.b16 %v131, %v130
    %v144 = vpack.c.b16 %v133, %v132
    %v145 = vpack.c.b16 %v135, %v134
    %v146 = vpack.c.b16 %v137, %v136
    %v147 = vpack.c.b16 %v139, %v138
    %v172 = vunpack.c.l.b16 %v60
    %v173 = vunpack.c.l.b16 %v61
    %v174 = vunpack.c.l.b16 %v62
    %v175 = vunpack.c.l.b16 %v63
    %v176 = vunpack.c.l.b16 %v64
    %v177 = vunpack.c.l.b16 %v65
    %v178 = vunpack.c.l.b16 %v66
    %v179 = vunpack.c.l.b16 %v67
    %v180 = vunpack.c.l.b16 %v68
    %v181 = vunpack.c.l.b16 %v69
    %v182 = vunpack.c.l.b16 %v70
    %v183 = vunpack.c.l.b16 %v71
    %v184 = vunpack.c.l.b16 %v72
    %v185 = vunpack.c.l.b16 %v73
    %v186 = vunpack.c.l.b16 %v74
    %v187 = vunpack.c.l.b16 %v75
    %v188 = vpack.c.b16 %v173, %v172
    %v189 = vpack.c.b16 %v175, %v174
    %v190 = vpack.c.b16 %v177, %v176
    %v191 = vpack.c.b16 %v179, %v178
    %v192 = vpack.c.b16 %v181, %v180
    %v193 = vpack.c.b16 %v183, %v182
    %v194 = vpack.c.b16 %v185, %v184
    %v195 = vpack.c.b16 %v187, %v186
    %204 = vmatprep.subr.bf16.mxu0 0
    %205 = vmatpush1.bf16.msra.mxu0 %v195
    %206 = vmatprep.subr.bf16.mxu0 0
    %207 = vmatpush1.bf16.msra.mxu0 %v194
    %208 = vmatprep.subr.bf16.mxu0 0
    %209 = vmatpush1.bf16.msra.mxu0 %v193
    %210 = vmatprep.subr.bf16.mxu0 0
    %211 = vmatpush1.bf16.msra.mxu0 %v192
    %212 = vmatprep.subr.bf16.mxu0 0
    %213 = vmatpush1.bf16.msra.mxu0 %v191
    %214 = vmatprep.subr.bf16.mxu0 0
    %215 = vmatpush1.bf16.msra.mxu0 %v190
    %216 = vmatprep.subr.bf16.mxu0 0
    %217 = vmatpush1.bf16.msra.mxu0 %v189
    %218 = vmatprep.subr.bf16.mxu0 0
    %219 = vmatpush1.bf16.msra.mxu0 %v188
    %220 = vmatprep.subr.bf16.mxu0 0
    %221 = vmatpush2.bf16.msra.mxu0 0
    %222 = vmatprep.subr.bf16.mxu0 0
    %223 = vmatpush2.bf16.msra.mxu0 0
    %224 = vmatprep.subr.bf16.mxu0 0
    %225 = vmatpush2.bf16.msra.mxu0 0
    %226 = vmatprep.subr.bf16.mxu0 0
    %227 = vmatpush2.bf16.msra.mxu0 0
    %228 = vmatprep.subr.bf16.mxu0 0
    %229 = vmatpush2.bf16.msra.mxu0 0
    %230 = vmatprep.subr.bf16.mxu0 0
    %231 = vmatpush2.bf16.msra.mxu0 0
    %232 = vmatprep.subr.bf16.mxu0 0
    %233 = vmatpush2.bf16.msra.mxu0 0
    %234 = vmatprep.subr.bf16.mxu0 0
    %235 = vmatpush2.bf16.msra.mxu0 0
    %236 = vmatprep.mubr.bf16.mxu0 0
    %237 = vmatmul.mubr.bf16.gmra.mxu0 %v140
    %v238 = vpop.f32.mrf.mxu0
    %v239 = vadd.f32 0.0, %v238
    %v240 = vpop.f32.mrf.mxu0
    %v241 = vpop.f32.mrf.mxu0
    %v242 = vadd.f32 0.0, %v241
    %v243 = vpop.f32.mrf.mxu0
    %244 = vmatprep.mubr.bf16.mxu0 0
    %245 = vmatmul.mubr.bf16.gmra.mxu0 %v141
    %v246 = vpop.f32.mrf.mxu0
    %v247 = vadd.f32 0.0, %v246
    %v248 = vpop.f32.mrf.mxu0
    %v249 = vpop.f32.mrf.mxu0
    %v250 = vadd.f32 0.0, %v249
    %v251 = vpop.f32.mrf.mxu0
    %252 = vmatprep.mubr.bf16.mxu0 0
    %253 = vmatmul.mubr.bf16.gmra.mxu0 %v142
    %v254 = vpop.f32.mrf.mxu0
    %v255 = vadd.f32 0.0, %v254
    %v256 = vpop.f32.mrf.mxu0
    %v257 = vpop.f32.mrf.mxu0
    %v258 = vadd.f32 0.0, %v257
    %v259 = vpop.f32.mrf.mxu0
    %260 = vmatprep.mubr.bf16.mxu0 0
    %261 = vmatmul.mubr.bf16.gmra.mxu0 %v143
    %v262 = vpop.f32.mrf.mxu0
    %v263 = vadd.f32 0.0, %v262
    %v264 = vpop.f32.mrf.mxu0
    %v265 = vpop.f32.mrf.mxu0
    %v266 = vadd.f32 0.0, %v265
    %v267 = vpop.f32.mrf.mxu0
    %268 = vmatprep.mubr.bf16.mxu0 0
    %269 = vmatmul.mubr.bf16.gmra.mxu0 %v144
    %v270 = vpop.f32.mrf.mxu0
    %v271 = vadd.f32 0.0, %v270
    %v272 = vpop.f32.mrf.mxu0
    %v273 = vpop.f32.mrf.mxu0
    %v274 = vadd.f32 0.0, %v273
    %v275 = vpop.f32.mrf.mxu0
    %276 = vmatprep.mubr.bf16.mxu0 0
    %277 = vmatmul.mubr.bf16.gmra.mxu0 %v145
    %v278 = vpop.f32.mrf.mxu0
    %v279 = vadd.f32 0.0, %v278
    %v280 = vpop.f32.mrf.mxu0
    %v281 = vpop.f32.mrf.mxu0
    %v282 = vadd.f32 0.0, %v281
    %v283 = vpop.f32.mrf.mxu0
    %284 = vmatprep.mubr.bf16.mxu0 0
    %285 = vmatmul.mubr.bf16.gmra.mxu0 %v146
    %v286 = vpop.f32.mrf.mxu0
    %v287 = vadd.f32 0.0, %v286
    %v288 = vpop.f32.mrf.mxu0
    %v289 = vpop.f32.mrf.mxu0
    %v290 = vadd.f32 0.0, %v289
    %v291 = vpop.f32.mrf.mxu0
    %292 = vmatprep.mubr.bf16.mxu0 0
    %293 = vmatmul.mubr.bf16.gmra.mxu0 %v147
    %v294 = vpop.f32.mrf.mxu0
    %v295 = vadd.f32 0.0, %v294
    %v296 = vpop.f32.mrf.mxu0
    %v297 = vpop.f32.mrf.mxu0
    %v298 = vadd.f32 0.0, %v297
    %v299 = vpop.f32.mrf.mxu0
    %300 = vdwg.mxu0
    %v301 = vadd.f32 %v76, %v239
    %v302 = vadd.f32 %v77, %v242
    %v303 = vadd.f32 %v78, %v247
    %v304 = vadd.f32 %v79, %v250
    %v305 = vadd.f32 %v80, %v255
    %v306 = vadd.f32 %v81, %v258
    %v307 = vadd.f32 %v82, %v263
    %v308 = vadd.f32 %v83, %v266
    %v309 = vadd.f32 %v84, %v271
    %v310 = vadd.f32 %v85, %v274
    %v311 = vadd.f32 %v86, %v279
    %v312 = vadd.f32 %v87, %v282
    %v313 = vadd.f32 %v88, %v287
    %v314 = vadd.f32 %v89, %v290
    %v315 = vadd.f32 %v90, %v295
    %v316 = vadd.f32 %v91, %v298
    %317 = vst [vmem:[#allocation2] sm:$0xff] %v301
    %318 = vst [vmem:[#allocation2 + $0x8] sm:$0xff] %v302
    %319 = vst [vmem:[#allocation2 + $0x10] sm:$0xff] %v303
    %320 = vst [vmem:[#allocation2 + $0x18] sm:$0xff] %v304
    %321 = vst [vmem:[#allocation2 + $0x20] sm:$0xff] %v305
    %322 = vst [vmem:[#allocation2 + $0x28] sm:$0xff] %v306
    %323 = vst [vmem:[#allocation2 + $0x30] sm:$0xff] %v307
    %324 = vst [vmem:[#allocation2 + $0x38] sm:$0xff] %v308
    %325 = vst [vmem:[#allocation2 + $0x40] sm:$0xff] %v309
    %326 = vst [vmem:[#allocation2 + $0x48] sm:$0xff] %v310
    %327 = vst [vmem:[#allocation2 + $0x50] sm:$0xff] %v311
    %328 = vst [vmem:[#allocation2 + $0x58] sm:$0xff] %v312
    %329 = vst [vmem:[#allocation2 + $0x60] sm:$0xff] %v313
    %330 = vst [vmem:[#allocation2 + $0x68] sm:$0xff] %v314
    %331 = vst [vmem:[#allocation2 + $0x70] sm:$0xff] %v315
    %332 = vst [vmem:[#allocation2 + $0x78] sm:$0xff] %v316
    // Predicated region
    $region30: #{graphsage_forward.3} parent=1 // pred_check
      %p333 = pneg %p35
    $region31: #{graphsage_forward.3} parent=1 // pred_check_branch
      %335 = sbr.rel (%p333) target = $region33
    $region32: #{graphsage_forward.3} parent=1 // pred_region
      %s336 = smul.u32 0, 128
      %s337 = sshra.s32 %s336, 3
      %s338 = sand.u32 %s336, 7
      %s339 = smul.addr %s337, 4
      %s340 = scalar_lea.vmem %s2, %s339
      %v341 = vld [vmem:[%s340] sm:$0xf]
      %v342 = vld [vmem:[%s340 + $0x4] sm:$0xf]
      %v343 = vld [vmem:[%s340 + $0x8] sm:$0xf]
      %v344 = vld [vmem:[%s340 + $0xc] sm:$0xf]
      %v345 = vld [vmem:[%s340 + $0x10] sm:$0xf]
      %v346 = vld [vmem:[%s340 + $0x14] sm:$0xf]
      %v347 = vld [vmem:[%s340 + $0x18] sm:$0xf]
      %v348 = vld [vmem:[%s340 + $0x1c] sm:$0xf]
      %v349 = vld [vmem:[%s340 + $0x20] sm:$0xf]
      %v350 = vld [vmem:[%s340 + $0x24] sm:$0xf]
      %v351 = vld [vmem:[%s340 + $0x28] sm:$0xf]
      %v352 = vld [vmem:[%s340 + $0x2c] sm:$0xf]
      %v353 = vld [vmem:[%s340 + $0x30] sm:$0xf]
      %v354 = vld [vmem:[%s340 + $0x34] sm:$0xf]
      %v355 = vld [vmem:[%s340 + $0x38] sm:$0xf]
      %v356 = vld [vmem:[%s340 + $0x3c] sm:$0xf]
      %v357 = vld [vmem:[#allocation2] sm:$0xff]
      %v358 = vld [vmem:[#allocation2 + $0x8] sm:$0xff]
      %v359 = vld [vmem:[#allocation2 + $0x10] sm:$0xff]
      %v360 = vld [vmem:[#allocation2 + $0x18] sm:$0xff]
      %v361 = vld [vmem:[#allocation2 + $0x20] sm:$0xff]
      %v362 = vld [vmem:[#allocation2 + $0x28] sm:$0xff]
      %v363 = vld [vmem:[#allocation2 + $0x30] sm:$0xff]
      %v364 = vld [vmem:[#allocation2 + $0x38] sm:$0xff]
      %v365 = vld [vmem:[#allocation2 + $0x40] sm:$0xff]
      %v366 = vld [vmem:[#allocation2 + $0x48] sm:$0xff]
      %v367 = vld [vmem:[#allocation2 + $0x50] sm:$0xff]
      %v368 = vld [vmem:[#allocation2 + $0x58] sm:$0xff]
      %v369 = vld [vmem:[#allocation2 + $0x60] sm:$0xff]
      %v370 = vld [vmem:[#allocation2 + $0x68] sm:$0xff]
      %v371 = vld [vmem:[#allocation2 + $0x70] sm:$0xff]
      %v372 = vld [vmem:[#allocation2 + $0x78] sm:$0xff]
      %v373 = vld [vmem:[%s1] sm:$0xff]
      %v374 = vld [vmem:[%s1 + $0x8] sm:$0xff]
      %v375 = vld [vmem:[%s1 + $0x10] sm:$0xff]
      %v376 = vld [vmem:[%s1 + $0x18] sm:$0xff]
      %v377 = vld [vmem:[%s1 + $0x20] sm:$0xff]
      %v378 = vld [vmem:[%s1 + $0x28] sm:$0xff]
      %v379 = vld [vmem:[%s1 + $0x30] sm:$0xff]
      %v380 = vld [vmem:[%s1 + $0x38] sm:$0xff]
      %v381 = vld [vmem:[%s1 + $0x40] sm:$0xff]
      %v382 = vld [vmem:[%s1 + $0x48] sm:$0xff]
      %v383 = vld [vmem:[%s1 + $0x50] sm:$0xff]
      %v384 = vld [vmem:[%s1 + $0x58] sm:$0xff]
      %v385 = vld [vmem:[%s1 + $0x60] sm:$0xff]
      %v386 = vld [vmem:[%s1 + $0x68] sm:$0xff]
      %v387 = vld [vmem:[%s1 + $0x70] sm:$0xff]
      %v388 = vld [vmem:[%s1 + $0x78] sm:$0xff]
      %v389 = vld [vmem:[#allocation3] sm:$0xf]
      %v390 = vld [vmem:[#allocation3 + $0x4] sm:$0xf]
      %v391 = vld [vmem:[#allocation3 + $0x8] sm:$0xf]
      %v392 = vld [vmem:[#allocation3 + $0xc] sm:$0xf]
      %v393 = vld [vmem:[#allocation3 + $0x10] sm:$0xf]
      %v394 = vld [vmem:[#allocation3 + $0x14] sm:$0xf]
      %v395 = vld [vmem:[#allocation3 + $0x18] sm:$0xf]
      %v396 = vld [vmem:[#allocation3 + $0x1c] sm:$0xf]
      %v397 = vld [vmem:[#allocation3 + $0x20] sm:$0xf]
      %v398 = vld [vmem:[#allocation3 + $0x24] sm:$0xf]
      %v399 = vld [vmem:[#allocation3 + $0x28] sm:$0xf]
      %v400 = vld [vmem:[#allocation3 + $0x2c] sm:$0xf]
      %v401 = vld [vmem:[#allocation3 + $0x30] sm:$0xf]
      %v402 = vld [vmem:[#allocation3 + $0x34] sm:$0xf]
      %v403 = vld [vmem:[#allocation3 + $0x38] sm:$0xf]
      %v404 = vld [vmem:[#allocation3 + $0x3c] sm:$0xf]
      %v405 = vld [vmem:[#allocation3 + $0x40] sm:$0xf]
      %v406 = vld [vmem:[#allocation3 + $0x44] sm:$0xf]
      %v407 = vld [vmem:[#allocation3 + $0x48] sm:$0xf]
      %v408 = vld [vmem:[#allocation3 + $0x4c] sm:$0xf]
      %v409 = vld [vmem:[#allocation3 + $0x50] sm:$0xf]
      %v410 = vld [vmem:[#allocation3 + $0x54] sm:$0xf]
      %v411 = vld [vmem:[#allocation3 + $0x58] sm:$0xf]
      %v412 = vld [vmem:[#allocation3 + $0x5c] sm:$0xf]
      %v413 = vld [vmem:[#allocation3 + $0x60] sm:$0xf]
      %v414 = vld [vmem:[#allocation3 + $0x64] sm:$0xf]
      %v415 = vld [vmem:[#allocation3 + $0x68] sm:$0xf]
      %v416 = vld [vmem:[#allocation3 + $0x6c] sm:$0xf]
      %v417 = vld [vmem:[#allocation3 + $0x70] sm:$0xf]
      %v418 = vld [vmem:[#allocation3 + $0x74] sm:$0xf]
      %v419 = vld [vmem:[#allocation3 + $0x78] sm:$0xf]
      %v420 = vld [vmem:[#allocation3 + $0x7c] sm:$0xf]
      %v421 = vld [vmem:[%s4] sm:$0x1]
      %423 = vset.pattern.permute.xlu0 0
      %424 = vperm.xlu0 %423, %v373
      %v425 = vpop.permute.xlu0 %424
      %428 = vset.pattern.permute.xlu0 0
      %429 = vperm.xlu0 %428, %v374
      %v430 = vpop.permute.xlu0 %429
      %433 = vset.pattern.permute.xlu0 0
      %434 = vperm.xlu0 %433, %v375
      %v435 = vpop.permute.xlu0 %434
      %438 = vset.pattern.permute.xlu0 0
      %439 = vperm.xlu0 %438, %v376
      %v440 = vpop.permute.xlu0 %439
      %443 = vset.pattern.permute.xlu0 0
      %444 = vperm.xlu0 %443, %v377
      %v445 = vpop.permute.xlu0 %444
      %448 = vset.pattern.permute.xlu0 0
      %449 = vperm.xlu0 %448, %v378
      %v450 = vpop.permute.xlu0 %449
      %453 = vset.pattern.permute.xlu0 0
      %454 = vperm.xlu0 %453, %v379
      %v455 = vpop.permute.xlu0 %454
      %458 = vset.pattern.permute.xlu0 0
      %459 = vperm.xlu0 %458, %v380
      %v460 = vpop.permute.xlu0 %459
      %463 = vset.pattern.permute.xlu0 0
      %464 = vperm.xlu0 %463, %v381
      %v465 = vpop.permute.xlu0 %464
      %468 = vset.pattern.permute.xlu0 0
      %469 = vperm.xlu0 %468, %v382
      %v470 = vpop.permute.xlu0 %469
      %473 = vset.pattern.permute.xlu0 0
      %474 = vperm.xlu0 %473, %v383
      %v475 = vpop.permute.xlu0 %474
      %478 = vset.pattern.permute.xlu0 0
      %479 = vperm.xlu0 %478, %v384
      %v480 = vpop.permute.xlu0 %479
      %483 = vset.pattern.permute.xlu0 0
      %484 = vperm.xlu0 %483, %v385
      %v485 = vpop.permute.xlu0 %484
      %488 = vset.pattern.permute.xlu0 0
      %489 = vperm.xlu0 %488, %v386
      %v490 = vpop.permute.xlu0 %489
      %493 = vset.pattern.permute.xlu0 0
      %494 = vperm.xlu0 %493, %v387
      %v495 = vpop.permute.xlu0 %494
      %498 = vset.pattern.permute.xlu0 0
      %499 = vperm.xlu0 %498, %v388
      %v500 = vpop.permute.xlu0 %499
      %v502 = vmul.f32 %v357, %v425
      %v503 = vmul.f32 %v358, %v430
      %v504 = vmul.f32 %v359, %v435
      %v505 = vmul.f32 %v360, %v440
      %v506 = vmul.f32 %v361, %v445
      %v507 = vmul.f32 %v362, %v450
      %v508 = vmul.f32 %v363, %v455
      %v509 = vmul.f32 %v364, %v460
      %v510 = vmul.f32 %v365, %v465
      %v511 = vmul.f32 %v366, %v470
      %v512 = vmul.f32 %v367, %v475
      %v513 = vmul.f32 %v368, %v480
      %v514 = vmul.f32 %v369, %v485
      %v515 = vmul.f32 %v370, %v490
      %v516 = vmul.f32 %v371, %v495
      %v517 = vmul.f32 %v372, %v500
      %v518 = vpack.c.bf16 %v503, %v502
      %v519 = vpack.c.bf16 %v505, %v504
      %v520 = vpack.c.bf16 %v507, %v506
      %v521 = vpack.c.bf16 %v509, %v508
      %v522 = vpack.c.bf16 %v511, %v510
      %v523 = vpack.c.bf16 %v513, %v512
      %v524 = vpack.c.bf16 %v515, %v514
      %v525 = vpack.c.bf16 %v517, %v516
      %v542 = vunpack.c.l.b16 %v341
      %v543 = vunpack.c.l.b16 %v342
      %v544 = vunpack.c.l.b16 %v343
      %v545 = vunpack.c.l.b16 %v344
      %v546 = vunpack.c.l.b16 %v345
      %v547 = vunpack.c.l.b16 %v346
      %v548 = vunpack.c.l.b16 %v347
      %v549 = vunpack.c.l.b16 %v348
      %v550 = vunpack.c.l.b16 %v349
      %v551 = vunpack.c.l.b16 %v350
      %v552 = vunpack.c.l.b16 %v351
      %v553 = vunpack.c.l.b16 %v352
      %v554 = vunpack.c.l.b16 %v353
      %v555 = vunpack.c.l.b16 %v354
      %v556 = vunpack.c.l.b16 %v355
      %v557 = vunpack.c.l.b16 %v356
      %v558 = vpack.c.b16 %v543, %v542
      %v559 = vpack.c.b16 %v545, %v544
      %v560 = vpack.c.b16 %v547, %v546
      %v561 = vpack.c.b16 %v549, %v548
      %v562 = vpack.c.b16 %v551, %v550
      %v563 = vpack.c.b16 %v553, %v552
      %v564 = vpack.c.b16 %v555, %v554
      %v565 = vpack.c.b16 %v557, %v556
      %v575 = vlaneseq
      %v576 = vshrl.u32 %v575, 7
      %v577 = vsub.s32 0, %v576
      %v578 = vrot.slane %v421, %v577
      %v612 = vunpack.c.l.b16 %v389
      %v613 = vunpack.c.l.b16 %v390
      %v614 = vunpack.c.l.b16 %v391
      %v615 = vunpack.c.l.b16 %v392
      %v616 = vunpack.c.l.b16 %v393
      %v617 = vunpack.c.l.b16 %v394
      %v618 = vunpack.c.l.b16 %v395
      %v619 = vunpack.c.l.b16 %v396
      %v620 = vunpack.c.l.b16 %v397
      %v621 = vunpack.c.l.b16 %v398
      %v622 = vunpack.c.l.b16 %v399
      %v623 = vunpack.c.l.b16 %v400
      %v624 = vunpack.c.l.b16 %v401
      %v625 = vunpack.c.l.b16 %v402
      %v626 = vunpack.c.l.b16 %v403
      %v627 = vunpack.c.l.b16 %v404
      %v628 = vunpack.c.l.b16 %v405
      %v629 = vunpack.c.l.b16 %v406
      %v630 = vunpack.c.l.b16 %v407
      %v631 = vunpack.c.l.b16 %v408
      %v632 = vunpack.c.l.b16 %v409
      %v633 = vunpack.c.l.b16 %v410
      %v634 = vunpack.c.l.b16 %v411
      %v635 = vunpack.c.l.b16 %v412
      %v636 = vunpack.c.l.b16 %v413
      %v637 = vunpack.c.l.b16 %v414
      %v638 = vunpack.c.l.b16 %v415
      %v639 = vunpack.c.l.b16 %v416
      %v640 = vunpack.c.l.b16 %v417
      %v641 = vunpack.c.l.b16 %v418
      %v642 = vunpack.c.l.b16 %v419
      %v643 = vunpack.c.l.b16 %v420
      %v644 = vpack.c.b16 %v613, %v612
      %v645 = vpack.c.b16 %v615, %v614
      %v646 = vpack.c.b16 %v617, %v616
      %v647 = vpack.c.b16 %v619, %v618
      %v648 = vpack.c.b16 %v621, %v620
      %v649 = vpack.c.b16 %v623, %v622
      %v650 = vpack.c.b16 %v625, %v624
      %v651 = vpack.c.b16 %v627, %v626
      %v652 = vpack.c.b16 %v629, %v628
      %v653 = vpack.c.b16 %v631, %v630
      %v654 = vpack.c.b16 %v633, %v632
      %v655 = vpack.c.b16 %v635, %v634
      %v656 = vpack.c.b16 %v637, %v636
      %v657 = vpack.c.b16 %v639, %v638
      %v658 = vpack.c.b16 %v641, %v640
      %v659 = vpack.c.b16 %v643, %v642
      %676 = vmatprep.subr.bf16.mxu0 0
      %677 = vmatpush1.bf16.msra.mxu0 %v651
      %678 = vmatprep.subr.bf16.mxu0 0
      %679 = vmatpush1.bf16.msra.mxu0 %v650
      %680 = vmatprep.subr.bf16.mxu0 0
      %681 = vmatpush1.bf16.msra.mxu0 %v649
      %682 = vmatprep.subr.bf16.mxu0 0
      %683 = vmatpush1.bf16.msra.mxu0 %v648
      %684 = vmatprep.subr.bf16.mxu0 0
      %685 = vmatpush1.bf16.msra.mxu0 %v647
      %686 = vmatprep.subr.bf16.mxu0 0
      %687 = vmatpush1.bf16.msra.mxu0 %v646
      %688 = vmatprep.subr.bf16.mxu0 0
      %689 = vmatpush1.bf16.msra.mxu0 %v645
      %690 = vmatprep.subr.bf16.mxu0 0
      %691 = vmatpush1.bf16.msra.mxu0 %v644
      %692 = vmatprep.subr.bf16.mxu0 0
      %693 = vmatpush2.bf16.msra.mxu0 %v659
      %694 = vmatprep.subr.bf16.mxu0 0
      %695 = vmatpush2.bf16.msra.mxu0 %v658
      %696 = vmatprep.subr.bf16.mxu0 0
      %697 = vmatpush2.bf16.msra.mxu0 %v657
      %698 = vmatprep.subr.bf16.mxu0 0
      %699 = vmatpush2.bf16.msra.mxu0 %v656
      %700 = vmatprep.subr.bf16.mxu0 0
      %701 = vmatpush2.bf16.msra.mxu0 %v655
      %702 = vmatprep.subr.bf16.mxu0 0
      %703 = vmatpush2.bf16.msra.mxu0 %v654
      %704 = vmatprep.subr.bf16.mxu0 0
      %705 = vmatpush2.bf16.msra.mxu0 %v653
      %706 = vmatprep.subr.bf16.mxu0 0
      %707 = vmatpush2.bf16.msra.mxu0 %v652
      %708 = vmatprep.mubr.bf16.mxu0 %v558
      %709 = vmatmul.mubr.bf16.gmra.mxu0 %v518
      %v710 = vpop.f32.mrf.mxu0
      %v711 = vadd.f32 %v578, %v710
      %v712 = vpop.f32.mrf.mxu0
      %v713 = vpop.f32.mrf.mxu0
      %v714 = vadd.f32 %v578, %v713
      %v715 = vpop.f32.mrf.mxu0
      %716 = vmatprep.mubr.bf16.mxu0 %v559
      %717 = vmatmul.mubr.bf16.gmra.mxu0 %v519
      %v718 = vpop.f32.mrf.mxu0
      %v719 = vadd.f32 %v578, %v718
      %v720 = vpop.f32.mrf.mxu0
      %v721 = vpop.f32.mrf.mxu0
      %v722 = vadd.f32 %v578, %v721
      %v723 = vpop.f32.mrf.mxu0
      %724 = vmatprep.mubr.bf16.mxu0 %v560
      %725 = vmatmul.mubr.bf16.gmra.mxu0 %v520
      %v726 = vpop.f32.mrf.mxu0
      %v727 = vadd.f32 %v578, %v726
      %v728 = vpop.f32.mrf.mxu0
      %v729 = vpop.f32.mrf.mxu0
      %v730 = vadd.f32 %v578, %v729
      %v731 = vpop.f32.mrf.mxu0
      %732 = vmatprep.mubr.bf16.mxu0 %v561
      %733 = vmatmul.mubr.bf16.gmra.mxu0 %v521
      %v734 = vpop.f32.mrf.mxu0
      %v735 = vadd.f32 %v578, %v734
      %v736 = vpop.f32.mrf.mxu0
      %v737 = vpop.f32.mrf.mxu0
      %v738 = vadd.f32 %v578, %v737
      %v739 = vpop.f32.mrf.mxu0
      %740 = vmatprep.mubr.bf16.mxu0 %v562
      %741 = vmatmul.mubr.bf16.gmra.mxu0 %v522
      %v742 = vpop.f32.mrf.mxu0
      %v743 = vadd.f32 %v578, %v742
      %v744 = vpop.f32.mrf.mxu0
      %v745 = vpop.f32.mrf.mxu0
      %v746 = vadd.f32 %v578, %v745
      %v747 = vpop.f32.mrf.mxu0
      %748 = vmatprep.mubr.bf16.mxu0 %v563
      %749 = vmatmul.mubr.bf16.gmra.mxu0 %v523
      %v750 = vpop.f32.mrf.mxu0
      %v751 = vadd.f32 %v578, %v750
      %v752 = vpop.f32.mrf.mxu0
      %v753 = vpop.f32.mrf.mxu0
      %v754 = vadd.f32 %v578, %v753
      %v755 = vpop.f32.mrf.mxu0
      %756 = vmatprep.mubr.bf16.mxu0 %v564
      %757 = vmatmul.mubr.bf16.gmra.mxu0 %v524
      %v758 = vpop.f32.mrf.mxu0
      %v759 = vadd.f32 %v578, %v758
      %v760 = vpop.f32.mrf.mxu0
      %v761 = vpop.f32.mrf.mxu0
      %v762 = vadd.f32 %v578, %v761
      %v763 = vpop.f32.mrf.mxu0
      %764 = vmatprep.mubr.bf16.mxu0 %v565
      %765 = vmatmul.mubr.bf16.gmra.mxu0 %v525
      %v766 = vpop.f32.mrf.mxu0
      %v767 = vadd.f32 %v578, %v766
      %v768 = vpop.f32.mrf.mxu0
      %v769 = vpop.f32.mrf.mxu0
      %v770 = vadd.f32 %v578, %v769
      %v771 = vpop.f32.mrf.mxu0
      %772 = vdwg.mxu0
      %v773 = vmax.f32 %v711, 0.0
      %v774 = vmax.f32 %v714, 0.0
      %v775 = vmax.f32 %v719, 0.0
      %v776 = vmax.f32 %v722, 0.0
      %v777 = vmax.f32 %v727, 0.0
      %v778 = vmax.f32 %v730, 0.0
      %v779 = vmax.f32 %v735, 0.0
      %v780 = vmax.f32 %v738, 0.0
      %v781 = vmax.f32 %v743, 0.0
      %v782 = vmax.f32 %v746, 0.0
      %v783 = vmax.f32 %v751, 0.0
      %v784 = vmax.f32 %v754, 0.0
      %v785 = vmax.f32 %v759, 0.0
      %v786 = vmax.f32 %v762, 0.0
      %v787 = vmax.f32 %v767, 0.0
      %v788 = vmax.f32 %v770, 0.0
      %v789 = vpack.c.bf16 %v774, %v773
      %v790 = vpack.c.bf16 %v776, %v775
      %v791 = vpack.c.bf16 %v778, %v777
      %v792 = vpack.c.bf16 %v780, %v779
      %v793 = vpack.c.bf16 %v782, %v781
      %v794 = vpack.c.bf16 %v784, %v783
      %v795 = vpack.c.bf16 %v786, %v785
      %v796 = vpack.c.bf16 %v788, %v787
      %v805 = vunpack.c.l.b16 %v789
      %v806 = vunpack.c.h.b16 %v789
      %v807 = vunpack.c.l.b16 %v790
      %v808 = vunpack.c.h.b16 %v790
      %v809 = vunpack.c.l.b16 %v791
      %v810 = vunpack.c.h.b16 %v791
      %v811 = vunpack.c.l.b16 %v792
      %v812 = vunpack.c.h.b16 %v792
      %v813 = vunpack.c.l.b16 %v793
      %v814 = vunpack.c.h.b16 %v793
      %v815 = vunpack.c.l.b16 %v794
      %v816 = vunpack.c.h.b16 %v794
      %v817 = vunpack.c.l.b16 %v795
      %v818 = vunpack.c.h.b16 %v795
      %v819 = vunpack.c.l.b16 %v796
      %v820 = vunpack.c.h.b16 %v796
      %v821 = vpack.c.b16 %v805, %v805
      %v822 = vpack.c.b16 %v806, %v806
      %v823 = vpack.c.b16 %v807, %v807
      %v824 = vpack.c.b16 %v808, %v808
      %v825 = vpack.c.b16 %v809, %v809
      %v826 = vpack.c.b16 %v810, %v810
      %v827 = vpack.c.b16 %v811, %v811
      %v828 = vpack.c.b16 %v812, %v812
      %v829 = vpack.c.b16 %v813, %v813
      %v830 = vpack.c.b16 %v814, %v814
      %v831 = vpack.c.b16 %v815, %v815
      %v832 = vpack.c.b16 %v816, %v816
      %v833 = vpack.c.b16 %v817, %v817
      %v834 = vpack.c.b16 %v818, %v818
      %v835 = vpack.c.b16 %v819, %v819
      %v836 = vpack.c.b16 %v820, %v820
      %853 = vst [vmem:[%s5] sm:$0xf] %v821
      %854 = vst [vmem:[%s5 + $0x4] sm:$0xf] %v822
      %855 = vst [vmem:[%s5 + $0x8] sm:$0xf] %v823
      %856 = vst [vmem:[%s5 + $0xc] sm:$0xf] %v824
      %857 = vst [vmem:[%s5 + $0x10] sm:$0xf] %v825
      %858 = vst [vmem:[%s5 + $0x14] sm:$0xf] %v826
      %859 = vst [vmem:[%s5 + $0x18] sm:$0xf] %v827
      %860 = vst [vmem:[%s5 + $0x1c] sm:$0xf] %v828
      %861 = vst [vmem:[%s5 + $0x20] sm:$0xf] %v829
      %862 = vst [vmem:[%s5 + $0x24] sm:$0xf] %v830
      %863 = vst [vmem:[%s5 + $0x28] sm:$0xf] %v831
      %864 = vst [vmem:[%s5 + $0x2c] sm:$0xf] %v832
      %865 = vst [vmem:[%s5 + $0x30] sm:$0xf] %v833
      %866 = vst [vmem:[%s5 + $0x34] sm:$0xf] %v834
      %867 = vst [vmem:[%s5 + $0x38] sm:$0xf] %v835
      %868 = vst [vmem:[%s5 + $0x3c] sm:$0xf] %v836
    $region33: #{graphsage_forward.3} parent=1 // pred_fallthru
      _
    // Predicated region
    $region34: #{graphsage_forward.3} parent=1 // pred_check
      _
    $region35: #{graphsage_forward.3} parent=1 // pred_check_branch
      %870 = sbr.rel (0) target = $region37
    $region36: #{graphsage_forward.3} parent=1 // pred_region
      _
    $region37: #{graphsage_forward.3} parent=1 // pred_fallthru
      _
    // Predicated region
    $region38: #{graphsage_forward.3} parent=1 // pred_check
      _
    $region39: #{graphsage_forward.3} parent=1 // pred_check_branch
      %872 = sbr.rel (0) target = $region41
    $region40: #{graphsage_forward.3} parent=1 // pred_region
      _
    $region41: #{graphsage_forward.3} parent=1 // pred_fallthru
      _
    %873 = vsyncpa [#allocation4], 1

// kernel: graphsage_forward.5
$region0: #{graphsage_forward.5}
  #allocation0 [shape = 'u32[]', space=smem, size = 0x4, offset = 0x4, fixed_abs, tag = 'smem constant byte address 0x4 - core index']
  #allocation1 [shape = 'u32[144,128]{1,0:T(1,128)}', space=vmem, size = 0x12000, scoped, tag = 'internal scratch']
  #allocation2 [shape = 'f32[128,128]{1,0:T(8,128)}', space=vmem, size = 0x10000, scoped, tag = 'scratch operand']
  %s0 = inlined_call_operand.vmem [shape: bf16[128,128], index: 0, kind: input, shape index: {}]
  %s1 = inlined_call_operand.vmem [shape: f32[128,1], index: 1, kind: input, shape index: {}]
  %s2 = inlined_call_operand.vmem [shape: bf16[128,128], index: 2, kind: input, shape index: {}]
  %s3 = inlined_call_operand.vmem [shape: bf16[256,128], index: 3, kind: input, shape index: {}]
  %s4 = inlined_call_operand.vmem [shape: f32[1,128], index: 4, kind: input, shape index: {}]
  %s5 = inlined_call_operand.hbm [shape: f32[128,128], index: 5, kind: output, shape index: {}]
  %s6 = sld [smem:[#allocation0]]
  $region38: #{graphsage_forward.5} parent=0
    _
  %s8 = ssub.s32 1, %s6
  %s9 = scalar_select 0, %s8, %s6
  $region1: #{graphsage_forward.5} parent=0
    #allocation3 [shape = 'u8[65536]{0}', space=vmem, size = 0x10000, scoped, tag = 'output window, operand 0, single buffered']
    #allocation4 [shape = 's32[1]{0}', space=sflag, size = 0x4, scoped, tag = 'scoped memory for graphsage_forward.5']
    %10 = vsyncpa [#allocation4], 0
    // Predicated region
    $region2: #{graphsage_forward.5} parent=1 // pred_check
      _
    $region3: #{graphsage_forward.5} parent=1 // pred_check_branch
      %12 = sbr.rel (0) target = $region5
    $region4: #{graphsage_forward.5} parent=1 // pred_region
      _
    $region5: #{graphsage_forward.5} parent=1 // pred_fallthru
      _
    // Predicated region
    $region6: #{graphsage_forward.5} parent=1 // pred_check
      _
    $region7: #{graphsage_forward.5} parent=1 // pred_check_branch
      %14 = sbr.rel (0) target = $region9
    $region8: #{graphsage_forward.5} parent=1 // pred_region
      _
    $region9: #{graphsage_forward.5} parent=1 // pred_fallthru
      _
    // Predicated region
    $region10: #{graphsage_forward.5} parent=1 // pred_check
      _
    $region11: #{graphsage_forward.5} parent=1 // pred_check_branch
      %16 = sbr.rel (0) target = $region13
    $region12: #{graphsage_forward.5} parent=1 // pred_region
      _
    $region13: #{graphsage_forward.5} parent=1 // pred_fallthru
      _
    // Predicated region
    $region14: #{graphsage_forward.5} parent=1 // pred_check
      _
    $region15: #{graphsage_forward.5} parent=1 // pred_check_branch
      %18 = sbr.rel (0) target = $region17
    $region16: #{graphsage_forward.5} parent=1 // pred_region
      _
    $region17: #{graphsage_forward.5} parent=1 // pred_fallthru
      _
    // Predicated region
    $region18: #{graphsage_forward.5} parent=1 // pred_check
      _
    $region19: #{graphsage_forward.5} parent=1 // pred_check_branch
      %20 = sbr.rel (0) target = $region21
    $region20: #{graphsage_forward.5} parent=1 // pred_region
      _
    $region21: #{graphsage_forward.5} parent=1 // pred_fallthru
      _
    %p22 = scmp.eq.s32.totalorder 0, 0
    // Predicated region
    $region22: #{graphsage_forward.5} parent=1 // pred_check
      %p23 = pneg %p22
    $region23: #{graphsage_forward.5} parent=1 // pred_check_branch
      %25 = sbr.rel (%p23) target = $region25
    $region24: #{graphsage_forward.5} parent=1 // pred_region
      %26 = vst [vmem:[#allocation2] sm:$0xff] 0.0
      %27 = vst [vmem:[#allocation2 + $0x8] sm:$0xff] 0.0
      %28 = vst [vmem:[#allocation2 + $0x10] sm:$0xff] 0.0
      %29 = vst [vmem:[#allocation2 + $0x18] sm:$0xff] 0.0
      %30 = vst [vmem:[#allocation2 + $0x20] sm:$0xff] 0.0
      %31 = vst [vmem:[#allocation2 + $0x28] sm:$0xff] 0.0
      %32 = vst [vmem:[#allocation2 + $0x30] sm:$0xff] 0.0
      %33 = vst [vmem:[#allocation2 + $0x38] sm:$0xff] 0.0
      %34 = vst [vmem:[#allocation2 + $0x40] sm:$0xff] 0.0
      %35 = vst [vmem:[#allocation2 + $0x48] sm:$0xff] 0.0
      %36 = vst [vmem:[#allocation2 + $0x50] sm:$0xff] 0.0
      %37 = vst [vmem:[#allocation2 + $0x58] sm:$0xff] 0.0
      %38 = vst [vmem:[#allocation2 + $0x60] sm:$0xff] 0.0
      %39 = vst [vmem:[#allocation2 + $0x68] sm:$0xff] 0.0
      %40 = vst [vmem:[#allocation2 + $0x70] sm:$0xff] 0.0
      %41 = vst [vmem:[#allocation2 + $0x78] sm:$0xff] 0.0
    $region25: #{graphsage_forward.5} parent=1 // pred_fallthru
      _
    %s42 = smul.u32 0, 128
    %s43 = sshra.s32 %s42, 3
    %s44 = sand.u32 %s42, 7
    %s45 = smul.addr %s43, 4
    %s46 = scalar_lea.vmem %s2, %s45
    %v47 = vld [vmem:[%s46] sm:$0xf]
    %v48 = vld [vmem:[%s46 + $0x4] sm:$0xf]
    %v49 = vld [vmem:[%s46 + $0x8] sm:$0xf]
    %v50 = vld [vmem:[%s46 + $0xc] sm:$0xf]
    %v51 = vld [vmem:[%s46 + $0x10] sm:$0xf]
    %v52 = vld [vmem:[%s46 + $0x14] sm:$0xf]
    %v53 = vld [vmem:[%s46 + $0x18] sm:$0xf]
    %v54 = vld [vmem:[%s46 + $0x1c] sm:$0xf]
    %v55 = vld [vmem:[%s46 + $0x20] sm:$0xf]
    %v56 = vld [vmem:[%s46 + $0x24] sm:$0xf]
    %v57 = vld [vmem:[%s46 + $0x28] sm:$0xf]
    %v58 = vld [vmem:[%s46 + $0x2c] sm:$0xf]
    %v59 = vld [vmem:[%s46 + $0x30] sm:$0xf]
    %v60 = vld [vmem:[%s46 + $0x34] sm:$0xf]
    %v61 = vld [vmem:[%s46 + $0x38] sm:$0xf]
    %v62 = vld [vmem:[%s46 + $0x3c] sm:$0xf]
    %v63 = vld [vmem:[#allocation2] sm:$0xff]
    %v64 = vld [vmem:[#allocation2 + $0x8] sm:$0xff]
    %v65 = vld [vmem:[#allocation2 + $0x10] sm:$0xff]
    %v66 = vld [vmem:[#allocation2 + $0x18] sm:$0xff]
    %v67 = vld [vmem:[#allocation2 + $0x20] sm:$0xff]
    %v68 = vld [vmem:[#allocation2 + $0x28] sm:$0xff]
    %v69 = vld [vmem:[#allocation2 + $0x30] sm:$0xff]
    %v70 = vld [vmem:[#allocation2 + $0x38] sm:$0xff]
    %v71 = vld [vmem:[#allocation2 + $0x40] sm:$0xff]
    %v72 = vld [vmem:[#allocation2 + $0x48] sm:$0xff]
    %v73 = vld [vmem:[#allocation2 + $0x50] sm:$0xff]
    %v74 = vld [vmem:[#allocation2 + $0x58] sm:$0xff]
    %v75 = vld [vmem:[#allocation2 + $0x60] sm:$0xff]
    %v76 = vld [vmem:[#allocation2 + $0x68] sm:$0xff]
    %v77 = vld [vmem:[#allocation2 + $0x70] sm:$0xff]
    %v78 = vld [vmem:[#allocation2 + $0x78] sm:$0xff]
    %v79 = vld [vmem:[%s0] sm:$0xf]
    %v80 = vld [vmem:[%s0 + $0x4] sm:$0xf]
    %v81 = vld [vmem:[%s0 + $0x8] sm:$0xf]
    %v82 = vld [vmem:[%s0 + $0xc] sm:$0xf]
    %v83 = vld [vmem:[%s0 + $0x10] sm:$0xf]
    %v84 = vld [vmem:[%s0 + $0x14] sm:$0xf]
    %v85 = vld [vmem:[%s0 + $0x18] sm:$0xf]
    %v86 = vld [vmem:[%s0 + $0x1c] sm:$0xf]
    %v87 = vld [vmem:[%s0 + $0x20] sm:$0xf]
    %v88 = vld [vmem:[%s0 + $0x24] sm:$0xf]
    %v89 = vld [vmem:[%s0 + $0x28] sm:$0xf]
    %v90 = vld [vmem:[%s0 + $0x2c] sm:$0xf]
    %v91 = vld [vmem:[%s0 + $0x30] sm:$0xf]
    %v92 = vld [vmem:[%s0 + $0x34] sm:$0xf]
    %v93 = vld [vmem:[%s0 + $0x38] sm:$0xf]
    %v94 = vld [vmem:[%s0 + $0x3c] sm:$0xf]
    %v111 = vunpack.c.l.b16 %v79
    %v112 = vunpack.c.l.b16 %v80
    %v113 = vunpack.c.l.b16 %v81
    %v114 = vunpack.c.l.b16 %v82
    %v115 = vunpack.c.l.b16 %v83
    %v116 = vunpack.c.l.b16 %v84
    %v117 = vunpack.c.l.b16 %v85
    %v118 = vunpack.c.l.b16 %v86
    %v119 = vunpack.c.l.b16 %v87
    %v120 = vunpack.c.l.b16 %v88
    %v121 = vunpack.c.l.b16 %v89
    %v122 = vunpack.c.l.b16 %v90
    %v123 = vunpack.c.l.b16 %v91
    %v124 = vunpack.c.l.b16 %v92
    %v125 = vunpack.c.l.b16 %v93
    %v126 = vunpack.c.l.b16 %v94
    %v127 = vpack.c.b16 %v112, %v111
    %v128 = vpack.c.b16 %v114, %v113
    %v129 = vpack.c.b16 %v116, %v115
    %v130 = vpack.c.b16 %v118, %v117
    %v131 = vpack.c.b16 %v120, %v119
    %v132 = vpack.c.b16 %v122, %v121
    %v133 = vpack.c.b16 %v124, %v123
    %v134 = vpack.c.b16 %v126, %v125
    %v159 = vunpack.c.l.b16 %v47
    %v160 = vunpack.c.l.b16 %v48
    %v161 = vunpack.c.l.b16 %v49
    %v162 = vunpack.c.l.b16 %v50
    %v163 = vunpack.c.l.b16 %v51
    %v164 = vunpack.c.l.b16 %v52
    %v165 = vunpack.c.l.b16 %v53
    %v166 = vunpack.c.l.b16 %v54
    %v167 = vunpack.c.l.b16 %v55
    %v168 = vunpack.c.l.b16 %v56
    %v169 = vunpack.c.l.b16 %v57
    %v170 = vunpack.c.l.b16 %v58
    %v171 = vunpack.c.l.b16 %v59
    %v172 = vunpack.c.l.b16 %v60
    %v173 = vunpack.c.l.b16 %v61
    %v174 = vunpack.c.l.b16 %v62
    %v175 = vpack.c.b16 %v160, %v159
    %v176 = vpack.c.b16 %v162, %v161
    %v177 = vpack.c.b16 %v164, %v163
    %v178 = vpack.c.b16 %v166, %v165
    %v179 = vpack.c.b16 %v168, %v167
    %v180 = vpack.c.b16 %v170, %v169
    %v181 = vpack.c.b16 %v172, %v171
    %v182 = vpack.c.b16 %v174, %v173
    %191 = vmatprep.subr.bf16.mxu0 0
    %192 = vmatpush1.bf16.msra.mxu0 %v182
    %193 = vmatprep.subr.bf16.mxu0 0
    %194 = vmatpush1.bf16.msra.mxu0 %v181
    %195 = vmatprep.subr.bf16.mxu0 0
    %196 = vmatpush1.bf16.msra.mxu0 %v180
    %197 = vmatprep.subr.bf16.mxu0 0
    %198 = vmatpush1.bf16.msra.mxu0 %v179
    %199 = vmatprep.subr.bf16.mxu0 0
    %200 = vmatpush1.bf16.msra.mxu0 %v178
    %201 = vmatprep.subr.bf16.mxu0 0
    %202 = vmatpush1.bf16.msra.mxu0 %v177
    %203 = vmatprep.subr.bf16.mxu0 0
    %204 = vmatpush1.bf16.msra.mxu0 %v176
    %205 = vmatprep.subr.bf16.mxu0 0
    %206 = vmatpush1.bf16.msra.mxu0 %v175
    %207 = vmatprep.subr.bf16.mxu0 0
    %208 = vmatpush2.bf16.msra.mxu0 0
    %209 = vmatprep.subr.bf16.mxu0 0
    %210 = vmatpush2.bf16.msra.mxu0 0
    %211 = vmatprep.subr.bf16.mxu0 0
    %212 = vmatpush2.bf16.msra.mxu0 0
    %213 = vmatprep.subr.bf16.mxu0 0
    %214 = vmatpush2.bf16.msra.mxu0 0
    %215 = vmatprep.subr.bf16.mxu0 0
    %216 = vmatpush2.bf16.msra.mxu0 0
    %217 = vmatprep.subr.bf16.mxu0 0
    %218 = vmatpush2.bf16.msra.mxu0 0
    %219 = vmatprep.subr.bf16.mxu0 0
    %220 = vmatpush2.bf16.msra.mxu0 0
    %221 = vmatprep.subr.bf16.mxu0 0
    %222 = vmatpush2.bf16.msra.mxu0 0
    %223 = vmatprep.mubr.bf16.mxu0 0
    %224 = vmatmul.mubr.bf16.gmra.mxu0 %v127
    %v225 = vpop.f32.mrf.mxu0
    %v226 = vadd.f32 0.0, %v225
    %v227 = vpop.f32.mrf.mxu0
    %v228 = vpop.f32.mrf.mxu0
    %v229 = vadd.f32 0.0, %v228
    %v230 = vpop.f32.mrf.mxu0
    %231 = vmatprep.mubr.bf16.mxu0 0
    %232 = vmatmul.mubr.bf16.gmra.mxu0 %v128
    %v233 = vpop.f32.mrf.mxu0
    %v234 = vadd.f32 0.0, %v233
    %v235 = vpop.f32.mrf.mxu0
    %v236 = vpop.f32.mrf.mxu0
    %v237 = vadd.f32 0.0, %v236
    %v238 = vpop.f32.mrf.mxu0
    %239 = vmatprep.mubr.bf16.mxu0 0
    %240 = vmatmul.mubr.bf16.gmra.mxu0 %v129
    %v241 = vpop.f32.mrf.mxu0
    %v242 = vadd.f32 0.0, %v241
    %v243 = vpop.f32.mrf.mxu0
    %v244 = vpop.f32.mrf.mxu0
    %v245 = vadd.f32 0.0, %v244
    %v246 = vpop.f32.mrf.mxu0
    %247 = vmatprep.mubr.bf16.mxu0 0
    %248 = vmatmul.mubr.bf16.gmra.mxu0 %v130
    %v249 = vpop.f32.mrf.mxu0
    %v250 = vadd.f32 0.0, %v249
    %v251 = vpop.f32.mrf.mxu0
    %v252 = vpop.f32.mrf.mxu0
    %v253 = vadd.f32 0.0, %v252
    %v254 = vpop.f32.mrf.mxu0
    %255 = vmatprep.mubr.bf16.mxu0 0
    %256 = vmatmul.mubr.bf16.gmra.mxu0 %v131
    %v257 = vpop.f32.mrf.mxu0
    %v258 = vadd.f32 0.0, %v257
    %v259 = vpop.f32.mrf.mxu0
    %v260 = vpop.f32.mrf.mxu0
    %v261 = vadd.f32 0.0, %v260
    %v262 = vpop.f32.mrf.mxu0
    %263 = vmatprep.mubr.bf16.mxu0 0
    %264 = vmatmul.mubr.bf16.gmra.mxu0 %v132
    %v265 = vpop.f32.mrf.mxu0
    %v266 = vadd.f32 0.0, %v265
    %v267 = vpop.f32.mrf.mxu0
    %v268 = vpop.f32.mrf.mxu0
    %v269 = vadd.f32 0.0, %v268
    %v270 = vpop.f32.mrf.mxu0
    %271 = vmatprep.mubr.bf16.mxu0 0
    %272 = vmatmul.mubr.bf16.gmra.mxu0 %v133
    %v273 = vpop.f32.mrf.mxu0
    %v274 = vadd.f32 0.0, %v273
    %v275 = vpop.f32.mrf.mxu0
    %v276 = vpop.f32.mrf.mxu0
    %v277 = vadd.f32 0.0, %v276
    %v278 = vpop.f32.mrf.mxu0
    %279 = vmatprep.mubr.bf16.mxu0 0
    %280 = vmatmul.mubr.bf16.gmra.mxu0 %v134
    %v281 = vpop.f32.mrf.mxu0
    %v282 = vadd.f32 0.0, %v281
    %v283 = vpop.f32.mrf.mxu0
    %v284 = vpop.f32.mrf.mxu0
    %v285 = vadd.f32 0.0, %v284
    %v286 = vpop.f32.mrf.mxu0
    %287 = vdwg.mxu0
    %v288 = vadd.f32 %v63, %v226
    %v289 = vadd.f32 %v64, %v229
    %v290 = vadd.f32 %v65, %v234
    %v291 = vadd.f32 %v66, %v237
    %v292 = vadd.f32 %v67, %v242
    %v293 = vadd.f32 %v68, %v245
    %v294 = vadd.f32 %v69, %v250
    %v295 = vadd.f32 %v70, %v253
    %v296 = vadd.f32 %v71, %v258
    %v297 = vadd.f32 %v72, %v261
    %v298 = vadd.f32 %v73, %v266
    %v299 = vadd.f32 %v74, %v269
    %v300 = vadd.f32 %v75, %v274
    %v301 = vadd.f32 %v76, %v277
    %v302 = vadd.f32 %v77, %v282
    %v303 = vadd.f32 %v78, %v285
    %304 = vst [vmem:[#allocation2] sm:$0xff] %v288
    %305 = vst [vmem:[#allocation2 + $0x8] sm:$0xff] %v289
    %306 = vst [vmem:[#allocation2 + $0x10] sm:$0xff] %v290
    %307 = vst [vmem:[#allocation2 + $0x18] sm:$0xff] %v291
    %308 = vst [vmem:[#allocation2 + $0x20] sm:$0xff] %v292
    %309 = vst [vmem:[#allocation2 + $0x28] sm:$0xff] %v293
    %310 = vst [vmem:[#allocation2 + $0x30] sm:$0xff] %v294
    %311 = vst [vmem:[#allocation2 + $0x38] sm:$0xff] %v295
    %312 = vst [vmem:[#allocation2 + $0x40] sm:$0xff] %v296
    %313 = vst [vmem:[#allocation2 + $0x48] sm:$0xff] %v297
    %314 = vst [vmem:[#allocation2 + $0x50] sm:$0xff] %v298
    %315 = vst [vmem:[#allocation2 + $0x58] sm:$0xff] %v299
    %316 = vst [vmem:[#allocation2 + $0x60] sm:$0xff] %v300
    %317 = vst [vmem:[#allocation2 + $0x68] sm:$0xff] %v301
    %318 = vst [vmem:[#allocation2 + $0x70] sm:$0xff] %v302
    %319 = vst [vmem:[#allocation2 + $0x78] sm:$0xff] %v303
    // Predicated region
    $region26: #{graphsage_forward.5} parent=1 // pred_check
      %p320 = pneg %p22
    $region27: #{graphsage_forward.5} parent=1 // pred_check_branch
      %322 = sbr.rel (%p320) target = $region29
    $region28: #{graphsage_forward.5} parent=1 // pred_region
      %s323 = smul.u32 0, 128
      %s324 = sshra.s32 %s323, 3
      %s325 = sand.u32 %s323, 7
      %s326 = smul.addr %s324, 4
      %s327 = scalar_lea.vmem %s2, %s326
      %v328 = vld [vmem:[%s327] sm:$0xf]
      %v329 = vld [vmem:[%s327 + $0x4] sm:$0xf]
      %v330 = vld [vmem:[%s327 + $0x8] sm:$0xf]
      %v331 = vld [vmem:[%s327 + $0xc] sm:$0xf]
      %v332 = vld [vmem:[%s327 + $0x10] sm:$0xf]
      %v333 = vld [vmem:[%s327 + $0x14] sm:$0xf]
      %v334 = vld [vmem:[%s327 + $0x18] sm:$0xf]
      %v335 = vld [vmem:[%s327 + $0x1c] sm:$0xf]
      %v336 = vld [vmem:[%s327 + $0x20] sm:$0xf]
      %v337 = vld [vmem:[%s327 + $0x24] sm:$0xf]
      %v338 = vld [vmem:[%s327 + $0x28] sm:$0xf]
      %v339 = vld [vmem:[%s327 + $0x2c] sm:$0xf]
      %v340 = vld [vmem:[%s327 + $0x30] sm:$0xf]
      %v341 = vld [vmem:[%s327 + $0x34] sm:$0xf]
      %v342 = vld [vmem:[%s327 + $0x38] sm:$0xf]
      %v343 = vld [vmem:[%s327 + $0x3c] sm:$0xf]
      %v344 = vld [vmem:[#allocation2] sm:$0xff]
      %v345 = vld [vmem:[#allocation2 + $0x8] sm:$0xff]
      %v346 = vld [vmem:[#allocation2 + $0x10] sm:$0xff]
      %v347 = vld [vmem:[#allocation2 + $0x18] sm:$0xff]
      %v348 = vld [vmem:[#allocation2 + $0x20] sm:$0xff]
      %v349 = vld [vmem:[#allocation2 + $0x28] sm:$0xff]
      %v350 = vld [vmem:[#allocation2 + $0x30] sm:$0xff]
      %v351 = vld [vmem:[#allocation2 + $0x38] sm:$0xff]
      %v352 = vld [vmem:[#allocation2 + $0x40] sm:$0xff]
      %v353 = vld [vmem:[#allocation2 + $0x48] sm:$0xff]
      %v354 = vld [vmem:[#allocation2 + $0x50] sm:$0xff]
      %v355 = vld [vmem:[#allocation2 + $0x58] sm:$0xff]
      %v356 = vld [vmem:[#allocation2 + $0x60] sm:$0xff]
      %v357 = vld [vmem:[#allocation2 + $0x68] sm:$0xff]
      %v358 = vld [vmem:[#allocation2 + $0x70] sm:$0xff]
      %v359 = vld [vmem:[#allocation2 + $0x78] sm:$0xff]
      %v360 = vld [vmem:[%s1] sm:$0xff]
      %v361 = vld [vmem:[%s1 + $0x8] sm:$0xff]
      %v362 = vld [vmem:[%s1 + $0x10] sm:$0xff]
      %v363 = vld [vmem:[%s1 + $0x18] sm:$0xff]
      %v364 = vld [vmem:[%s1 + $0x20] sm:$0xff]
      %v365 = vld [vmem:[%s1 + $0x28] sm:$0xff]
      %v366 = vld [vmem:[%s1 + $0x30] sm:$0xff]
      %v367 = vld [vmem:[%s1 + $0x38] sm:$0xff]
      %v368 = vld [vmem:[%s1 + $0x40] sm:$0xff]
      %v369 = vld [vmem:[%s1 + $0x48] sm:$0xff]
      %v370 = vld [vmem:[%s1 + $0x50] sm:$0xff]
      %v371 = vld [vmem:[%s1 + $0x58] sm:$0xff]
      %v372 = vld [vmem:[%s1 + $0x60] sm:$0xff]
      %v373 = vld [vmem:[%s1 + $0x68] sm:$0xff]
      %v374 = vld [vmem:[%s1 + $0x70] sm:$0xff]
      %v375 = vld [vmem:[%s1 + $0x78] sm:$0xff]
      %v376 = vld [vmem:[%s3] sm:$0xf]
      %v377 = vld [vmem:[%s3 + $0x4] sm:$0xf]
      %v378 = vld [vmem:[%s3 + $0x8] sm:$0xf]
      %v379 = vld [vmem:[%s3 + $0xc] sm:$0xf]
      %v380 = vld [vmem:[%s3 + $0x10] sm:$0xf]
      %v381 = vld [vmem:[%s3 + $0x14] sm:$0xf]
      %v382 = vld [vmem:[%s3 + $0x18] sm:$0xf]
      %v383 = vld [vmem:[%s3 + $0x1c] sm:$0xf]
      %v384 = vld [vmem:[%s3 + $0x20] sm:$0xf]
      %v385 = vld [vmem:[%s3 + $0x24] sm:$0xf]
      %v386 = vld [vmem:[%s3 + $0x28] sm:$0xf]
      %v387 = vld [vmem:[%s3 + $0x2c] sm:$0xf]
      %v388 = vld [vmem:[%s3 + $0x30] sm:$0xf]
      %v389 = vld [vmem:[%s3 + $0x34] sm:$0xf]
      %v390 = vld [vmem:[%s3 + $0x38] sm:$0xf]
      %v391 = vld [vmem:[%s3 + $0x3c] sm:$0xf]
      %v392 = vld [vmem:[%s3 + $0x40] sm:$0xf]
      %v393 = vld [vmem:[%s3 + $0x44] sm:$0xf]
      %v394 = vld [vmem:[%s3 + $0x48] sm:$0xf]
      %v395 = vld [vmem:[%s3 + $0x4c] sm:$0xf]
      %v396 = vld [vmem:[%s3 + $0x50] sm:$0xf]
      %v397 = vld [vmem:[%s3 + $0x54] sm:$0xf]
      %v398 = vld [vmem:[%s3 + $0x58] sm:$0xf]
      %v399 = vld [vmem:[%s3 + $0x5c] sm:$0xf]
      %v400 = vld [vmem:[%s3 + $0x60] sm:$0xf]
      %v401 = vld [vmem:[%s3 + $0x64] sm:$0xf]
      %v402 = vld [vmem:[%s3 + $0x68] sm:$0xf]
      %v403 = vld [vmem:[%s3 + $0x6c] sm:$0xf]
      %v404 = vld [vmem:[%s3 + $0x70] sm:$0xf]
      %v405 = vld [vmem:[%s3 + $0x74] sm:$0xf]
      %v406 = vld [vmem:[%s3 + $0x78] sm:$0xf]
      %v407 = vld [vmem:[%s3 + $0x7c] sm:$0xf]
      %v408 = vld [vmem:[%s4] sm:$0x1]
      %410 = vset.pattern.permute.xlu0 0
      %411 = vperm.xlu0 %410, %v360
      %v412 = vpop.permute.xlu0 %411
      %415 = vset.pattern.permute.xlu0 0
      %416 = vperm.xlu0 %415, %v361
      %v417 = vpop.permute.xlu0 %416
      %420 = vset.pattern.permute.xlu0 0
      %421 = vperm.xlu0 %420, %v362
      %v422 = vpop.permute.xlu0 %421
      %425 = vset.pattern.permute.xlu0 0
      %426 = vperm.xlu0 %425, %v363
      %v427 = vpop.permute.xlu0 %426
      %430 = vset.pattern.permute.xlu0 0
      %431 = vperm.xlu0 %430, %v364
      %v432 = vpop.permute.xlu0 %431
      %435 = vset.pattern.permute.xlu0 0
      %436 = vperm.xlu0 %435, %v365
      %v437 = vpop.permute.xlu0 %436
      %440 = vset.pattern.permute.xlu0 0
      %441 = vperm.xlu0 %440, %v366
      %v442 = vpop.permute.xlu0 %441
      %445 = vset.pattern.permute.xlu0 0
      %446 = vperm.xlu0 %445, %v367
      %v447 = vpop.permute.xlu0 %446
      %450 = vset.pattern.permute.xlu0 0
      %451 = vperm.xlu0 %450, %v368
      %v452 = vpop.permute.xlu0 %451
      %455 = vset.pattern.permute.xlu0 0
      %456 = vperm.xlu0 %455, %v369
      %v457 = vpop.permute.xlu0 %456
      %460 = vset.pattern.permute.xlu0 0
      %461 = vperm.xlu0 %460, %v370
      %v462 = vpop.permute.xlu0 %461
      %465 = vset.pattern.permute.xlu0 0
      %466 = vperm.xlu0 %465, %v371
      %v467 = vpop.permute.xlu0 %466
      %470 = vset.pattern.permute.xlu0 0
      %471 = vperm.xlu0 %470, %v372
      %v472 = vpop.permute.xlu0 %471
      %475 = vset.pattern.permute.xlu0 0
      %476 = vperm.xlu0 %475, %v373
      %v477 = vpop.permute.xlu0 %476
      %480 = vset.pattern.permute.xlu0 0
      %481 = vperm.xlu0 %480, %v374
      %v482 = vpop.permute.xlu0 %481
      %485 = vset.pattern.permute.xlu0 0
      %486 = vperm.xlu0 %485, %v375
      %v487 = vpop.permute.xlu0 %486
      %v489 = vmul.f32 %v344, %v412
      %v490 = vmul.f32 %v345, %v417
      %v491 = vmul.f32 %v346, %v422
      %v492 = vmul.f32 %v347, %v427
      %v493 = vmul.f32 %v348, %v432
      %v494 = vmul.f32 %v349, %v437
      %v495 = vmul.f32 %v350, %v442
      %v496 = vmul.f32 %v351, %v447
      %v497 = vmul.f32 %v352, %v452
      %v498 = vmul.f32 %v353, %v457
      %v499 = vmul.f32 %v354, %v462
      %v500 = vmul.f32 %v355, %v467
      %v501 = vmul.f32 %v356, %v472
      %v502 = vmul.f32 %v357, %v477
      %v503 = vmul.f32 %v358, %v482
      %v504 = vmul.f32 %v359, %v487
      %v505 = vpack.c.bf16 %v490, %v489
      %v506 = vpack.c.bf16 %v492, %v491
      %v507 = vpack.c.bf16 %v494, %v493
      %v508 = vpack.c.bf16 %v496, %v495
      %v509 = vpack.c.bf16 %v498, %v497
      %v510 = vpack.c.bf16 %v500, %v499
      %v511 = vpack.c.bf16 %v502, %v501
      %v512 = vpack.c.bf16 %v504, %v503
      %v529 = vunpack.c.l.b16 %v328
      %v530 = vunpack.c.l.b16 %v329
      %v531 = vunpack.c.l.b16 %v330
      %v532 = vunpack.c.l.b16 %v331
      %v533 = vunpack.c.l.b16 %v332
      %v534 = vunpack.c.l.b16 %v333
      %v535 = vunpack.c.l.b16 %v334
      %v536 = vunpack.c.l.b16 %v335
      %v537 = vunpack.c.l.b16 %v336
      %v538 = vunpack.c.l.b16 %v337
      %v539 = vunpack.c.l.b16 %v338
      %v540 = vunpack.c.l.b16 %v339
      %v541 = vunpack.c.l.b16 %v340
      %v542 = vunpack.c.l.b16 %v341
      %v543 = vunpack.c.l.b16 %v342
      %v544 = vunpack.c.l.b16 %v343
      %v545 = vpack.c.b16 %v530, %v529
      %v546 = vpack.c.b16 %v532, %v531
      %v547 = vpack.c.b16 %v534, %v533
      %v548 = vpack.c.b16 %v536, %v535
      %v549 = vpack.c.b16 %v538, %v537
      %v550 = vpack.c.b16 %v540, %v539
      %v551 = vpack.c.b16 %v542, %v541
      %v552 = vpack.c.b16 %v544, %v543
      %v562 = vlaneseq
      %v563 = vshrl.u32 %v562, 7
      %v564 = vsub.s32 0, %v563
      %v565 = vrot.slane %v408, %v564
      %v599 = vunpack.c.l.b16 %v376
      %v600 = vunpack.c.l.b16 %v377
      %v601 = vunpack.c.l.b16 %v378
      %v602 = vunpack.c.l.b16 %v379
      %v603 = vunpack.c.l.b16 %v380
      %v604 = vunpack.c.l.b16 %v381
      %v605 = vunpack.c.l.b16 %v382
      %v606 = vunpack.c.l.b16 %v383
      %v607 = vunpack.c.l.b16 %v384
      %v608 = vunpack.c.l.b16 %v385
      %v609 = vunpack.c.l.b16 %v386
      %v610 = vunpack.c.l.b16 %v387
      %v611 = vunpack.c.l.b16 %v388
      %v612 = vunpack.c.l.b16 %v389
      %v613 = vunpack.c.l.b16 %v390
      %v614 = vunpack.c.l.b16 %v391
      %v615 = vunpack.c.l.b16 %v392
      %v616 = vunpack.c.l.b16 %v393
      %v617 = vunpack.c.l.b16 %v394
      %v618 = vunpack.c.l.b16 %v395
      %v619 = vunpack.c.l.b16 %v396
      %v620 = vunpack.c.l.b16 %v397
      %v621 = vunpack.c.l.b16 %v398
      %v622 = vunpack.c.l.b16 %v399
      %v623 = vunpack.c.l.b16 %v400
      %v624 = vunpack.c.l.b16 %v401
      %v625 = vunpack.c.l.b16 %v402
      %v626 = vunpack.c.l.b16 %v403
      %v627 = vunpack.c.l.b16 %v404
      %v628 = vunpack.c.l.b16 %v405
      %v629 = vunpack.c.l.b16 %v406
      %v630 = vunpack.c.l.b16 %v407
      %v631 = vpack.c.b16 %v600, %v599
      %v632 = vpack.c.b16 %v602, %v601
      %v633 = vpack.c.b16 %v604, %v603
      %v634 = vpack.c.b16 %v606, %v605
      %v635 = vpack.c.b16 %v608, %v607
      %v636 = vpack.c.b16 %v610, %v609
      %v637 = vpack.c.b16 %v612, %v611
      %v638 = vpack.c.b16 %v614, %v613
      %v639 = vpack.c.b16 %v616, %v615
      %v640 = vpack.c.b16 %v618, %v617
      %v641 = vpack.c.b16 %v620, %v619
      %v642 = vpack.c.b16 %v622, %v621
      %v643 = vpack.c.b16 %v624, %v623
      %v644 = vpack.c.b16 %v626, %v625
      %v645 = vpack.c.b16 %v628, %v627
      %v646 = vpack.c.b16 %v630, %v629
      %663 = vmatprep.subr.bf16.mxu0 0
      %664 = vmatpush1.bf16.msra.mxu0 %v638
      %665 = vmatprep.subr.bf16.mxu0 0
      %666 = vmatpush1.bf16.msra.mxu0 %v637
      %667 = vmatprep.subr.bf16.mxu0 0
      %668 = vmatpush1.bf16.msra.mxu0 %v636
      %669 = vmatprep.subr.bf16.mxu0 0
      %670 = vmatpush1.bf16.msra.mxu0 %v635
      %671 = vmatprep.subr.bf16.mxu0 0
      %672 = vmatpush1.bf16.msra.mxu0 %v634
      %673 = vmatprep.subr.bf16.mxu0 0
      %674 = vmatpush1.bf16.msra.mxu0 %v633
      %675 = vmatprep.subr.bf16.mxu0 0
      %676 = vmatpush1.bf16.msra.mxu0 %v632
      %677 = vmatprep.subr.bf16.mxu0 0
      %678 = vmatpush1.bf16.msra.mxu0 %v631
      %679 = vmatprep.subr.bf16.mxu0 0
      %680 = vmatpush2.bf16.msra.mxu0 %v646
      %681 = vmatprep.subr.bf16.mxu0 0
      %682 = vmatpush2.bf16.msra.mxu0 %v645
      %683 = vmatprep.subr.bf16.mxu0 0
      %684 = vmatpush2.bf16.msra.mxu0 %v644
      %685 = vmatprep.subr.bf16.mxu0 0
      %686 = vmatpush2.bf16.msra.mxu0 %v643
      %687 = vmatprep.subr.bf16.mxu0 0
      %688 = vmatpush2.bf16.msra.mxu0 %v642
      %689 = vmatprep.subr.bf16.mxu0 0
      %690 = vmatpush2.bf16.msra.mxu0 %v641
      %691 = vmatprep.subr.bf16.mxu0 0
      %692 = vmatpush2.bf16.msra.mxu0 %v640
      %693 = vmatprep.subr.bf16.mxu0 0
      %694 = vmatpush2.bf16.msra.mxu0 %v639
      %695 = vmatprep.mubr.bf16.mxu0 %v545
      %696 = vmatmul.mubr.bf16.gmra.mxu0 %v505
      %v697 = vpop.f32.mrf.mxu0
      %v698 = vadd.f32 %v565, %v697
      %v699 = vpop.f32.mrf.mxu0
      %v700 = vpop.f32.mrf.mxu0
      %v701 = vadd.f32 %v565, %v700
      %v702 = vpop.f32.mrf.mxu0
      %703 = vmatprep.mubr.bf16.mxu0 %v546
      %704 = vmatmul.mubr.bf16.gmra.mxu0 %v506
      %v705 = vpop.f32.mrf.mxu0
      %v706 = vadd.f32 %v565, %v705
      %v707 = vpop.f32.mrf.mxu0
      %v708 = vpop.f32.mrf.mxu0
      %v709 = vadd.f32 %v565, %v708
      %v710 = vpop.f32.mrf.mxu0
      %711 = vmatprep.mubr.bf16.mxu0 %v547
      %712 = vmatmul.mubr.bf16.gmra.mxu0 %v507
      %v713 = vpop.f32.mrf.mxu0
      %v714 = vadd.f32 %v565, %v713
      %v715 = vpop.f32.mrf.mxu0
      %v716 = vpop.f32.mrf.mxu0
      %v717 = vadd.f32 %v565, %v716
      %v718 = vpop.f32.mrf.mxu0
      %719 = vmatprep.mubr.bf16.mxu0 %v548
      %720 = vmatmul.mubr.bf16.gmra.mxu0 %v508
      %v721 = vpop.f32.mrf.mxu0
      %v722 = vadd.f32 %v565, %v721
      %v723 = vpop.f32.mrf.mxu0
      %v724 = vpop.f32.mrf.mxu0
      %v725 = vadd.f32 %v565, %v724
      %v726 = vpop.f32.mrf.mxu0
      %727 = vmatprep.mubr.bf16.mxu0 %v549
      %728 = vmatmul.mubr.bf16.gmra.mxu0 %v509
      %v729 = vpop.f32.mrf.mxu0
      %v730 = vadd.f32 %v565, %v729
      %v731 = vpop.f32.mrf.mxu0
      %v732 = vpop.f32.mrf.mxu0
      %v733 = vadd.f32 %v565, %v732
      %v734 = vpop.f32.mrf.mxu0
      %735 = vmatprep.mubr.bf16.mxu0 %v550
      %736 = vmatmul.mubr.bf16.gmra.mxu0 %v510
      %v737 = vpop.f32.mrf.mxu0
      %v738 = vadd.f32 %v565, %v737
      %v739 = vpop.f32.mrf.mxu0
      %v740 = vpop.f32.mrf.mxu0
      %v741 = vadd.f32 %v565, %v740
      %v742 = vpop.f32.mrf.mxu0
      %743 = vmatprep.mubr.bf16.mxu0 %v551
      %744 = vmatmul.mubr.bf16.gmra.mxu0 %v511
      %v745 = vpop.f32.mrf.mxu0
      %v746 = vadd.f32 %v565, %v745
      %v747 = vpop.f32.mrf.mxu0
      %v748 = vpop.f32.mrf.mxu0
      %v749 = vadd.f32 %v565, %v748
      %v750 = vpop.f32.mrf.mxu0
      %751 = vmatprep.mubr.bf16.mxu0 %v552
      %752 = vmatmul.mubr.bf16.gmra.mxu0 %v512
      %v753 = vpop.f32.mrf.mxu0
      %v754 = vadd.f32 %v565, %v753
      %v755 = vpop.f32.mrf.mxu0
      %v756 = vpop.f32.mrf.mxu0
      %v757 = vadd.f32 %v565, %v756
      %v758 = vpop.f32.mrf.mxu0
      %759 = vdwg.mxu0
      %760 = vst [vmem:[#allocation3] sm:$0xff] %v698
      %761 = vst [vmem:[#allocation3 + $0x8] sm:$0xff] %v701
      %762 = vst [vmem:[#allocation3 + $0x10] sm:$0xff] %v706
      %763 = vst [vmem:[#allocation3 + $0x18] sm:$0xff] %v709
      %764 = vst [vmem:[#allocation3 + $0x20] sm:$0xff] %v714
      %765 = vst [vmem:[#allocation3 + $0x28] sm:$0xff] %v717
      %766 = vst [vmem:[#allocation3 + $0x30] sm:$0xff] %v722
      %767 = vst [vmem:[#allocation3 + $0x38] sm:$0xff] %v725
      %768 = vst [vmem:[#allocation3 + $0x40] sm:$0xff] %v730
      %769 = vst [vmem:[#allocation3 + $0x48] sm:$0xff] %v733
      %770 = vst [vmem:[#allocation3 + $0x50] sm:$0xff] %v738
      %771 = vst [vmem:[#allocation3 + $0x58] sm:$0xff] %v741
      %772 = vst [vmem:[#allocation3 + $0x60] sm:$0xff] %v746
      %773 = vst [vmem:[#allocation3 + $0x68] sm:$0xff] %v749
      %774 = vst [vmem:[#allocation3 + $0x70] sm:$0xff] %v754
      %775 = vst [vmem:[#allocation3 + $0x78] sm:$0xff] %v757
    $region29: #{graphsage_forward.5} parent=1 // pred_fallthru
      _
    // Predicated region
    $region30: #{graphsage_forward.5} parent=1 // pred_check
      _
    $region31: #{graphsage_forward.5} parent=1 // pred_check_branch
      %777 = sbr.rel (0) target = $region33
    $region32: #{graphsage_forward.5} parent=1 // pred_region
      %s779 = ssub.s32 2048, 2048
      %780 = vsyncadd [#allocation4], %s779
      %s781 = sshll.u32 [#allocation3], 4
      %s782 = int_to_ptr.vmem [resolvable:$true] %s781
      %787 = dma.vmem_to_hbm [thread:$0]  %s782, 2048, %s5, [#allocation4], 128, 128, 8
    $region33: #{graphsage_forward.5} parent=1 // pred_fallthru
      _
    // Predicated region
    $region34: #{graphsage_forward.5} parent=1 // pred_check
      _
    $region35: #{graphsage_forward.5} parent=1 // pred_check_branch
      %789 = sbr.rel (0) target = $region37
    $region36: #{graphsage_forward.5} parent=1 // pred_region
      %790 = dma.done [#allocation4], 2048
    $region37: #{graphsage_forward.5} parent=1 // pred_fallthru
      _
    %791 = vsyncpa [#allocation4], 1

</llo_original>
